<compile_context>
chip_gen: v7x
topology: tpu7x:2x2x1
jax: 0.10.0
libtpu: 0.0.40
codegen_flags: <defaults>
</compile_context>

<pallas_src>
import functools

import jax
import jax.numpy as jnp
from jax.experimental import pallas as pl
from jax.experimental.pallas import tpu as pltpu


def _decoder_kernel(
    x_ref, bias_ref,
    wqkv_ref, bqkv_ref, wo_ref, bo_ref,
    ln1_g_ref, ln1_b_ref,
    w1_ref, b1_ref, w2_ref, b2_ref,
    ln2_g_ref, ln2_b_ref,
    o_ref,
    acc_ref,                       # VMEM (T, D) f32: activation resident across layers
    *, num_heads,
):
    layer = pl.program_id(1)

    # Load the batch tile into the resident accumulator on the first layer only.
    @pl.when(layer == 0)
    def _():
        acc_ref[...] = x_ref[0].astype(jnp.float32)

    x = acc_ref[...]                               # (T, D) f32
    T, D = x.shape
    H = num_heads
    hd = D // H
    key_bias = bias_ref[0]                         # (1, T) additive mask (0 / -1e9)

    # ---- fused QKV projection: one MXU op, bf16 in / f32 accumulation ----
    qkv = jnp.dot(x.astype(jnp.bfloat16), wqkv_ref[0],
                  preferred_element_type=jnp.float32) + bqkv_ref[0]     # (T, 3D)
    q, k, v = qkv[:, :D], qkv[:, D:2 * D], qkv[:, 2 * D:]
    # NOTE: 1/sqrt(hd) was folded into wq/bq on the host.

    # ---- batched multi-head attention ----
    qh = jnp.stack([q[:, h * hd:(h + 1) * hd] for h in range(H)], axis=0)
    kh = jnp.stack([k[:, h * hd:(h + 1) * hd] for h in range(H)], axis=0)
    vh = jnp.stack([v[:, h * hd:(h + 1) * hd] for h in range(H)], axis=0)
    qh = qh.astype(jnp.bfloat16)
    kh = kh.astype(jnp.bfloat16)
    vh = vh.astype(jnp.bfloat16)

    s = jnp.einsum('htd,hsd->hts', qh, kh,
                   preferred_element_type=jnp.float32)                  # (H, T, T)
    s = s + key_bias[None, :, :]                   # mask padded keys
    s = s - s.max(axis=-1, keepdims=True)
    p = jnp.exp(s)
    p = p * pl.reciprocal(p.sum(axis=-1, keepdims=True), approx=True)
    ctx = jnp.einsum('hts,hsd->htd', p.astype(jnp.bfloat16), vh,
                     preferred_element_type=jnp.float32)                # (H, T, hd)
    ctx = jnp.concatenate([ctx[h] for h in range(H)], axis=-1)          # (T, D)

    # ---- single output projection ----
    attn = jnp.dot(ctx.astype(jnp.bfloat16), wo_ref[0],
                   preferred_element_type=jnp.float32) + bo_ref[0]

    # ---- residual + LayerNorm 1 (f32) ----
    h1 = x + attn
    mu = h1.mean(axis=-1, keepdims=True)
    var = ((h1 - mu) ** 2).mean(axis=-1, keepdims=True)
    h1 = (h1 - mu) * jax.lax.rsqrt(var + 1e-5) * ln1_g_ref[0] + ln1_b_ref[0]

    # ---- FFN (bf16 MXU inputs, f32 accumulation / elementwise) ----
    f = jnp.dot(h1.astype(jnp.bfloat16), w1_ref[0],
                preferred_element_type=jnp.float32) + b1_ref[0]
    # TODO(synk): PyTorch nn.GELU default is the exact erf form; tanh approx
    # kept here for guaranteed Mosaic lowering (difference is ~1e-3).
    f = jax.nn.gelu(f, approximate=True)
    f = jnp.dot(f.astype(jnp.bfloat16), w2_ref[0],
                preferred_element_type=jnp.float32) + b2_ref[0]

    # ---- residual + LayerNorm 2 (f32) ----
    y = h1 + f
    mu2 = y.mean(axis=-1, keepdims=True)
    var2 = ((y - mu2) ** 2).mean(axis=-1, keepdims=True)
    y = (y - mu2) * jax.lax.rsqrt(var2 + 1e-5) * ln2_g_ref[0] + ln2_b_ref[0]

    acc_ref[...] = y                               # stays in VMEM for next layer

    # TODO(synk): dropout is identity (eval mode); training-mode dropout would
    # need pltpu.prng_seed / prng_random_bits.
    @pl.when(layer == pl.num_programs(1) - 1)
    def _():
        o_ref[0] = y.astype(o_ref.dtype)


def decoder_forward(hidden_states, padding_mask, packed, num_heads):
    """Run the whole decoder stack in one pallas_call."""
    B, T, D = hidden_states.shape
    L = packed["wqkv"].shape[0]
    F = packed["w1"].shape[-1]

    key_bias = jnp.where(padding_mask, -1e9, 0.0).astype(jnp.float32)
    key_bias = key_bias.reshape(B, 1, T)

    def wspec(shape):                 # per-layer streamed weight / bias / LN param
        return pl.BlockSpec((1,) + shape, lambda b, l, _s=shape: (l,) + (0,) * len(_s))

    in_specs = [
        pl.BlockSpec((1, T, D), lambda b, l: (b, 0, 0)),   # x (resident per b)
        pl.BlockSpec((1, 1, T), lambda b, l: (b, 0, 0)),   # additive key mask
        wspec((D, 3 * D)), wspec((1, 3 * D)),              # wqkv, bqkv
        wspec((D, D)), wspec((1, D)),                      # wo, bo
        wspec((1, D)), wspec((1, D)),                      # ln1 gamma, beta
        wspec((D, F)), wspec((1, F)),                      # w1, b1
        wspec((F, D)), wspec((1, D)),                      # w2, b2
        wspec((1, D)), wspec((1, D)),                      # ln2 gamma, beta
    ]

    # VMEM budget: double-buffered streamed inputs + resident activation/scratch.
    # TODO(synk): for large D/F on v7x (64 MiB VMEM) the FFN weights should be
    # tiled/streamed over F instead of kept whole per layer.
    per_step_in = (2 * (D * 3 * D + D * D + D * F + F * D)      # bf16 weights
                   + 4 * (3 * D + D + F + 5 * D)                # f32 biases + LN
                   + 4 * (T * D + T))                           # x tile + mask
    vmem_bytes = 2 * per_step_in + 4 * 2 * T * D + (8 << 20)    # dbl-buf + out/scratch + margin
    vmem_limit = int(min(max(vmem_bytes, 32 << 20), 100 << 20))

    kernel = functools.partial(_decoder_kernel, num_heads=num_heads)
    return pl.pallas_call(
        kernel,
        out_shape=jax.ShapeDtypeStruct((B, T, D), hidden_states.dtype),
        grid=(B, L),
        in_specs=in_specs,
        out_specs=pl.BlockSpec((1, T, D), lambda b, l: (b, 0, 0)),
        scratch_shapes=[pltpu.VMEM((T, D), jnp.float32)],
        compiler_params=pltpu.CompilerParams(
            dimension_semantics=("parallel", "arbitrary"),
            vmem_limit_bytes=vmem_limit),
    )(
        hidden_states, key_bias,
        packed["wqkv"], packed["bqkv"], packed["wo"], packed["bo"],
        packed["ln1_g"], packed["ln1_b"],
        packed["w1"], packed["b1"], packed["w2"], packed["b2"],
        packed["ln2_g"], packed["ln2_b"],
    )


# ----------------------------- parameters -----------------------------------

def init_block_params(key, embed_dim, ffn_dim, bias=True):
    ks = jax.random.split(key, 6)
    s = 0.02
    z = lambda n: jnp.zeros((1, n), jnp.float32)
    p = {
        "wq": s * jax.random.normal(ks[0], (embed_dim, embed_dim), jnp.float32),
        "wk": s * jax.random.normal(ks[1], (embed_dim, embed_dim), jnp.float32),
        "wv": s * jax.random.normal(ks[2], (embed_dim, embed_dim), jnp.float32),
        "wo": s * jax.random.normal(ks[3], (embed_dim, embed_dim), jnp.float32),
        "w1": s * jax.random.normal(ks[4], (embed_dim, ffn_dim), jnp.float32),
        "w2": s * jax.random.normal(ks[5], (ffn_dim, embed_dim), jnp.float32),
        "bq": z(embed_dim), "bk": z(embed_dim), "bv": z(embed_dim),
        "bo": z(embed_dim), "b1": z(ffn_dim), "b2": z(embed_dim),
        "ln1_g": jnp.ones((1, embed_dim), jnp.float32), "ln1_b": z(embed_dim),
        "ln2_g": jnp.ones((1, embed_dim), jnp.float32), "ln2_b": z(embed_dim),
    }
    if not bias:
        for name in ("bq", "bk", "bv", "bo", "b1", "b2"):
            p[name] = jnp.zeros_like(p[name])
    return p


def pack_decoder_params(block_params, num_heads):
    """Stack per-layer params, fuse QKV, fold 1/sqrt(hd), cast weights to bf16."""
    D = block_params[0]["wq"].shape[0]
    hd = D // num_heads
    scale = 1.0 / float(hd) ** 0.5

    def stack(name):
        return jnp.stack([p[name] for p in block_params], axis=0)

    wqkv = jnp.concatenate([stack("wq") * scale, stack("wk"), stack("wv")], axis=-1)
    bqkv = jnp.concatenate([stack("bq") * scale, stack("bk"), stack("bv")], axis=-1)
    return {
        "wqkv": wqkv.astype(jnp.bfloat16),
        "bqkv": bqkv.astype(jnp.float32),
        "wo": stack("wo").astype(jnp.bfloat16), "bo": stack("bo").astype(jnp.float32),
        "ln1_g": stack("ln1_g"), "ln1_b": stack("ln1_b"),
        "w1": stack("w1").astype(jnp.bfloat16), "b1": stack("b1").astype(jnp.float32),
        "w2": stack("w2").astype(jnp.bfloat16), "b2": stack("b2").astype(jnp.float32),
        "ln2_g": stack("ln2_g"), "ln2_b": stack("ln2_b"),
    }


# ------------------------- pure-JAX reference --------------------------------

def _layernorm(x, g, b, eps=1e-5):
    mu = x.mean(axis=-1, keepdims=True)
    var = ((x - mu) ** 2).mean(axis=-1, keepdims=True)
    return (x - mu) * jax.lax.rsqrt(var + eps) * g + b


def reference_decoder(x, padding_mask, block_params, num_heads):
    B, T, D = x.shape
    hd = D // num_heads
    scale = 1.0 / float(hd) ** 0.5
    mask = jnp.where(padding_mask, -1e9, 0.0)[:, None, None, :]
    for p in block_params:
        q = x @ p["wq"] + p["bq"]
        k = x @ p["wk"] + p["bk"]
        v = x @ p["wv"] + p["bv"]
        split = lambda a: a.reshape(B, T, num_heads, hd).transpose(0, 2, 1, 3)
        qh, kh, vh = split(q), split(k), split(v)
        s = jnp.einsum("bhtd,bhsd->bhts", qh, kh) * scale + mask
        pr = jax.nn.softmax(s, axis=-1)
        ctx = jnp.einsum("bhts,bhsd->bhtd", pr, vh)
        ctx = ctx.transpose(0, 2, 1, 3).reshape(B, T, D)
        h1 = _layernorm(x + ctx @ p["wo"] + p["bo"], p["ln1_g"], p["ln1_b"])
        f = jax.nn.gelu(h1 @ p["w1"] + p["b1"], approximate=True) @ p["w2"] + p["b2"]
        x = _layernorm(h1 + f, p["ln2_g"], p["ln2_b"])
    return x


if __name__ == "__main__":
    embed_dim, num_heads, depth = 32, 4, 2
    dropout, bias = 0.0, True            # dropout unused at inference
    B, T = 2, 8
    ffn_dim = 4 * embed_dim

    root = jax.random.PRNGKey(0)
    k_x, k_p = jax.random.split(root)
    hidden_states = jax.random.normal(k_x, (B, T, embed_dim), jnp.float32)
    # last 2 positions of batch element 1 are padded
    padding_mask = jnp.zeros((B, T), jnp.bool_).at[1, -2:].set(True)

    block_keys = jax.random.split(k_p, depth)
    block_params = [init_block_params(k, embed_dim, ffn_dim, bias) for k in block_keys]
    packed = pack_decoder_params(block_params, num_heads)

    out = decoder_forward(hidden_states, padding_mask, packed, num_heads)
    jax.block_until_ready(out)

    ref = reference_decoder(hidden_states, padding_mask, block_params, num_heads)
    assert out.shape == (B, T, embed_dim) and bool(jnp.all(jnp.isfinite(out)))
    assert bool(jnp.allclose(out, ref, atol=2e-2, rtol=2e-2)), "mismatch vs f32 reference"
    print("KERNEL_OK")
</pallas_src>

<mosaic_0001>
module attributes {stable_mosaic.version = 11 : i64} {
  func.func @_decoder_kernel(%arg0: i32, %arg1: i32, %arg2: memref<1x8x32xf32, #tpu.memory_space<vmem>>, %arg3: memref<1x1x8xf32, #tpu.memory_space<vmem>>, %arg4: memref<1x32x96xbf16, #tpu.memory_space<vmem>>, %arg5: memref<1x1x96xf32, #tpu.memory_space<vmem>>, %arg6: memref<1x32x32xbf16, #tpu.memory_space<vmem>>, %arg7: memref<1x1x32xf32, #tpu.memory_space<vmem>>, %arg8: memref<1x1x32xf32, #tpu.memory_space<vmem>>, %arg9: memref<1x1x32xf32, #tpu.memory_space<vmem>>, %arg10: memref<1x32x128xbf16, #tpu.memory_space<vmem>>, %arg11: memref<1x1x128xf32, #tpu.memory_space<vmem>>, %arg12: memref<1x128x32xbf16, #tpu.memory_space<vmem>>, %arg13: memref<1x1x32xf32, #tpu.memory_space<vmem>>, %arg14: memref<1x1x32xf32, #tpu.memory_space<vmem>>, %arg15: memref<1x1x32xf32, #tpu.memory_space<vmem>>, %arg16: memref<1x8x32xf32, #tpu.memory_space<vmem>>, %arg17: memref<8x32xf32, #tpu.memory_space<vmem>>) attributes {dimension_semantics = [#tpu.dimension_semantics<parallel>, #tpu.dimension_semantics<arbitrary>], iteration_bounds = array<i64: 2, 2>, scalar_prefetch = 0 : i64, scratch_operands = 1 : i64, tpu.core_type = #tpu.core_type<tc>, window_params = [{transform_indices = @transform_0, window_bounds = array<i64: 1, 8, 32>}, {transform_indices = @transform_1, window_bounds = array<i64: 1, 1, 8>}, {transform_indices = @transform_2, window_bounds = array<i64: 1, 32, 96>}, {transform_indices = @transform_3, window_bounds = array<i64: 1, 1, 96>}, {transform_indices = @transform_4, window_bounds = array<i64: 1, 32, 32>}, {transform_indices = @transform_5, window_bounds = array<i64: 1, 1, 32>}, {transform_indices = @transform_6, window_bounds = array<i64: 1, 1, 32>}, {transform_indices = @transform_7, window_bounds = array<i64: 1, 1, 32>}, {transform_indices = @transform_8, window_bounds = array<i64: 1, 32, 128>}, {transform_indices = @transform_9, window_bounds = array<i64: 1, 1, 128>}, {transform_indices = @transform_10, window_bounds = array<i64: 1, 128, 32>}, {transform_indices = @transform_11, window_bounds = array<i64: 1, 1, 32>}, {transform_indices = @transform_12, window_bounds = array<i64: 1, 1, 32>}, {transform_indices = @transform_13, window_bounds = array<i64: 1, 1, 32>}, {transform_indices = @transform_14, window_bounds = array<i64: 1, 8, 32>}]} {
    %c0_i32 = arith.constant 0 : i32
    %0 = arith.cmpi eq, %arg1, %c0_i32 : i32
    %1 = arith.extui %0 : i1 to i32
    %c0_i32_0 = arith.constant 0 : i32
    %2 = arith.cmpi ne, %1, %c0_i32_0 : i32
    scf.if %2 {
      %c0_65 = arith.constant 0 : index
      %c0_66 = arith.constant 0 : index
      %c0_67 = arith.constant 0 : index
      %167 = vector.load %arg2[%c0_65, %c0_66, %c0_67] : memref<1x8x32xf32, #tpu.memory_space<vmem>>, vector<1x8x32xf32>
      %168 = vector.shape_cast %167 : vector<1x8x32xf32> to vector<8x32xf32>
      %c0_68 = arith.constant 0 : index
      %c0_69 = arith.constant 0 : index
      %169 = vector.load %arg17[%c0_68, %c0_69] : memref<8x32xf32, #tpu.memory_space<vmem>>, vector<8x32xf32>
      tpu.vector_store %arg17[%c0_68, %c0_69], %168 {strides = array<i32>} : memref<8x32xf32, #tpu.memory_space<vmem>>, vector<8x32xf32>,
    } else {
    }
    %c0 = arith.constant 0 : index
    %c0_1 = arith.constant 0 : index
    %3 = vector.load %arg17[%c0, %c0_1] : memref<8x32xf32, #tpu.memory_space<vmem>>, vector<8x32xf32>
    %c0_2 = arith.constant 0 : index
    %c0_3 = arith.constant 0 : index
    %c0_4 = arith.constant 0 : index
    %4 = vector.load %arg3[%c0_2, %c0_3, %c0_4] : memref<1x1x8xf32, #tpu.memory_space<vmem>>, vector<1x1x8xf32>
    %5 = vector.shape_cast %4 : vector<1x1x8xf32> to vector<1x8xf32>
    %6 = arith.truncf %3 : vector<8x32xf32> to vector<8x32xbf16>
    %c0_5 = arith.constant 0 : index
    %c0_6 = arith.constant 0 : index
    %c0_7 = arith.constant 0 : index
    %7 = vector.load %arg4[%c0_5, %c0_6, %c0_7] : memref<1x32x96xbf16, #tpu.memory_space<vmem>>, vector<1x32x96xbf16>
    %8 = vector.shape_cast %7 : vector<1x32x96xbf16> to vector<32x96xbf16>
    %cst = arith.constant dense<0.000000e+00> : vector<8x96xf32>
    %9 = tpu.matmul %6, %8, %cst {dimension_numbers = #tpu.dot_dimension_numbers<[1], [0], [0], [1], [0, 0, 1, 1], [], []>} : vector<8x32xbf16>, vector<32x96xbf16>, vector<8x96xf32> -> vector<8x96xf32>
    %c0_8 = arith.constant 0 : index
    %c0_9 = arith.constant 0 : index
    %c0_10 = arith.constant 0 : index
    %10 = vector.load %arg5[%c0_8, %c0_9, %c0_10] : memref<1x1x96xf32, #tpu.memory_space<vmem>>, vector<1x1x96xf32>
    %11 = vector.shape_cast %10 : vector<1x1x96xf32> to vector<1x96xf32>
    %12 = vector.broadcast %11 : vector<1x96xf32> to vector<8x96xf32>
    %13 = arith.addf %9, %12 : vector<8x96xf32>
    %14 = vector.extract_strided_slice %13 {offsets = [0, 0], sizes = [8, 32], strides = [1, 1]} : vector<8x96xf32> to vector<8x32xf32>
    %15 = vector.extract_strided_slice %13 {offsets = [0, 32], sizes = [8, 32], strides = [1, 1]} : vector<8x96xf32> to vector<8x32xf32>
    %16 = vector.extract_strided_slice %13 {offsets = [0, 64], sizes = [8, 32], strides = [1, 1]} : vector<8x96xf32> to vector<8x32xf32>
    %17 = vector.extract_strided_slice %14 {offsets = [0, 0], sizes = [8, 8], strides = [1, 1]} : vector<8x32xf32> to vector<8x8xf32>
    %18 = vector.extract_strided_slice %14 {offsets = [0, 8], sizes = [8, 8], strides = [1, 1]} : vector<8x32xf32> to vector<8x8xf32>
    %19 = vector.extract_strided_slice %14 {offsets = [0, 16], sizes = [8, 8], strides = [1, 1]} : vector<8x32xf32> to vector<8x8xf32>
    %20 = vector.extract_strided_slice %14 {offsets = [0, 24], sizes = [8, 8], strides = [1, 1]} : vector<8x32xf32> to vector<8x8xf32>
    %21 = vector.shape_cast %17 : vector<8x8xf32> to vector<1x8x8xf32>
    %22 = vector.shape_cast %18 : vector<8x8xf32> to vector<1x8x8xf32>
    %23 = vector.shape_cast %19 : vector<8x8xf32> to vector<1x8x8xf32>
    %24 = vector.shape_cast %20 : vector<8x8xf32> to vector<1x8x8xf32>
    %25 = tpu.concatenate %21, %22, %23, %24 in 0 : vector<1x8x8xf32>, vector<1x8x8xf32>, vector<1x8x8xf32>, vector<1x8x8xf32> -> vector<4x8x8xf32>
    %26 = vector.extract_strided_slice %15 {offsets = [0, 0], sizes = [8, 8], strides = [1, 1]} : vector<8x32xf32> to vector<8x8xf32>
    %27 = vector.extract_strided_slice %15 {offsets = [0, 8], sizes = [8, 8], strides = [1, 1]} : vector<8x32xf32> to vector<8x8xf32>
    %28 = vector.extract_strided_slice %15 {offsets = [0, 16], sizes = [8, 8], strides = [1, 1]} : vector<8x32xf32> to vector<8x8xf32>
    %29 = vector.extract_strided_slice %15 {offsets = [0, 24], sizes = [8, 8], strides = [1, 1]} : vector<8x32xf32> to vector<8x8xf32>
    %30 = vector.shape_cast %26 : vector<8x8xf32> to vector<1x8x8xf32>
    %31 = vector.shape_cast %27 : vector<8x8xf32> to vector<1x8x8xf32>
    %32 = vector.shape_cast %28 : vector<8x8xf32> to vector<1x8x8xf32>
    %33 = vector.shape_cast %29 : vector<8x8xf32> to vector<1x8x8xf32>
    %34 = tpu.concatenate %30, %31, %32, %33 in 0 : vector<1x8x8xf32>, vector<1x8x8xf32>, vector<1x8x8xf32>, vector<1x8x8xf32> -> vector<4x8x8xf32>
    %35 = vector.extract_strided_slice %16 {offsets = [0, 0], sizes = [8, 8], strides = [1, 1]} : vector<8x32xf32> to vector<8x8xf32>
    %36 = vector.extract_strided_slice %16 {offsets = [0, 8], sizes = [8, 8], strides = [1, 1]} : vector<8x32xf32> to vector<8x8xf32>
    %37 = vector.extract_strided_slice %16 {offsets = [0, 16], sizes = [8, 8], strides = [1, 1]} : vector<8x32xf32> to vector<8x8xf32>
    %38 = vector.extract_strided_slice %16 {offsets = [0, 24], sizes = [8, 8], strides = [1, 1]} : vector<8x32xf32> to vector<8x8xf32>
    %39 = vector.shape_cast %35 : vector<8x8xf32> to vector<1x8x8xf32>
    %40 = vector.shape_cast %36 : vector<8x8xf32> to vector<1x8x8xf32>
    %41 = vector.shape_cast %37 : vector<8x8xf32> to vector<1x8x8xf32>
    %42 = vector.shape_cast %38 : vector<8x8xf32> to vector<1x8x8xf32>
    %43 = tpu.concatenate %39, %40, %41, %42 in 0 : vector<1x8x8xf32>, vector<1x8x8xf32>, vector<1x8x8xf32>, vector<1x8x8xf32> -> vector<4x8x8xf32>
    %44 = arith.truncf %25 : vector<4x8x8xf32> to vector<4x8x8xbf16>
    %45 = arith.truncf %34 : vector<4x8x8xf32> to vector<4x8x8xbf16>
    %46 = arith.truncf %43 : vector<4x8x8xf32> to vector<4x8x8xbf16>
    "tpu.trace_start"() <{level = 10 : i32, message = "htd,hsd->hts"}> : () -> ()
    %cst_11 = arith.constant dense<0.000000e+00> : vector<4x8x8xf32>
    %47 = tpu.matmul %44, %45, %cst_11 {dimension_numbers = #tpu.dot_dimension_numbers<[2], [2], [1], [1], [0, 0, 0, 1, 1, 1], [0], [0]>} : vector<4x8x8xbf16>, vector<4x8x8xbf16>, vector<4x8x8xf32> -> vector<4x8x8xf32>
    "tpu.trace_stop"() : () -> ()
    %48 = vector.shape_cast %5 : vector<1x8xf32> to vector<1x1x8xf32>
    %49 = vector.broadcast %48 : vector<1x1x8xf32> to vector<4x8x8xf32>
    %50 = arith.addf %47, %49 : vector<4x8x8xf32>
    %cst_12 = arith.constant dense<0xFF800000> : vector<4x8xf32>
    %51 = vector.multi_reduction <maximumf>, %50, %cst_12 [2] : vector<4x8x8xf32> to vector<4x8xf32>
    %52 = vector.shape_cast %51 : vector<4x8xf32> to vector<4x8x1xf32>
    %53 = vector.broadcast %52 : vector<4x8x1xf32> to vector<4x8x8xf32>
    %54 = arith.subf %50, %53 : vector<4x8x8xf32>
    %55 = math.exp %54 : vector<4x8x8xf32>
    %cst_13 = arith.constant dense<0.000000e+00> : vector<4x8xf32>
    %56 = vector.multi_reduction <add>, %55, %cst_13 [2] : vector<4x8x8xf32> to vector<4x8xf32>
    %57 = vector.shape_cast %56 : vector<4x8xf32> to vector<4x8x1xf32>
    %58 = tpu.reciprocal %57 {approx = true} : vector<4x8x1xf32> -> vector<4x8x1xf32>
    %59 = vector.broadcast %58 : vector<4x8x1xf32> to vector<4x8x8xf32>
    %60 = arith.mulf %55, %59 : vector<4x8x8xf32>
    %61 = arith.truncf %60 : vector<4x8x8xf32> to vector<4x8x8xbf16>
    "tpu.trace_start"() <{level = 10 : i32, message = "hts,hsd->htd"}> : () -> ()
    %cst_14 = arith.constant dense<0.000000e+00> : vector<4x8x8xf32>
    %62 = tpu.matmul %61, %46, %cst_14 {dimension_numbers = #tpu.dot_dimension_numbers<[2], [1], [1], [2], [0, 0, 0, 1, 1, 2], [0], [0]>} : vector<4x8x8xbf16>, vector<4x8x8xbf16>, vector<4x8x8xf32> -> vector<4x8x8xf32>
    "tpu.trace_stop"() : () -> ()
    %63 = vector.extract_strided_slice %62 {offsets = [0, 0, 0], sizes = [1, 8, 8], strides = [1, 1, 1]} : vector<4x8x8xf32> to vector<1x8x8xf32>
    %64 = vector.shape_cast %63 : vector<1x8x8xf32> to vector<8x8xf32>
    %65 = vector.extract_strided_slice %62 {offsets = [1, 0, 0], sizes = [1, 8, 8], strides = [1, 1, 1]} : vector<4x8x8xf32> to vector<1x8x8xf32>
    %66 = vector.shape_cast %65 : vector<1x8x8xf32> to vector<8x8xf32>
    %67 = vector.extract_strided_slice %62 {offsets = [2, 0, 0], sizes = [1, 8, 8], strides = [1, 1, 1]} : vector<4x8x8xf32> to vector<1x8x8xf32>
    %68 = vector.shape_cast %67 : vector<1x8x8xf32> to vector<8x8xf32>
    %69 = vector.extract_strided_slice %62 {offsets = [3, 0, 0], sizes = [1, 8, 8], strides = [1, 1, 1]} : vector<4x8x8xf32> to vector<1x8x8xf32>
    %70 = vector.shape_cast %69 : vector<1x8x8xf32> to vector<8x8xf32>
    %71 = tpu.concatenate %64, %66, %68, %70 in 1 : vector<8x8xf32>, vector<8x8xf32>, vector<8x8xf32>, vector<8x8xf32> -> vector<8x32xf32>
    %72 = arith.truncf %71 : vector<8x32xf32> to vector<8x32xbf16>
    %c0_15 = arith.constant 0 : index
    %c0_16 = arith.constant 0 : index
    %c0_17 = arith.constant 0 : index
    %73 = vector.load %arg6[%c0_15, %c0_16, %c0_17] : memref<1x32x32xbf16, #tpu.memory_space<vmem>>, vector<1x32x32xbf16>
    %74 = vector.shape_cast %73 : vector<1x32x32xbf16> to vector<32x32xbf16>
    %cst_18 = arith.constant dense<0.000000e+00> : vector<8x32xf32>
    %75 = tpu.matmul %72, %74, %cst_18 {dimension_numbers = #tpu.dot_dimension_numbers<[1], [0], [0], [1], [0, 0, 1, 1], [], []>} : vector<8x32xbf16>, vector<32x32xbf16>, vector<8x32xf32> -> vector<8x32xf32>
    %c0_19 = arith.constant 0 : index
    %c0_20 = arith.constant 0 : index
    %c0_21 = arith.constant 0 : index
    %76 = vector.load %arg7[%c0_19, %c0_20, %c0_21] : memref<1x1x32xf32, #tpu.memory_space<vmem>>, vector<1x1x32xf32>
    %77 = vector.shape_cast %76 : vector<1x1x32xf32> to vector<1x32xf32>
    %78 = vector.broadcast %77 : vector<1x32xf32> to vector<8x32xf32>
    %79 = arith.addf %75, %78 : vector<8x32xf32>
    %80 = arith.addf %3, %79 : vector<8x32xf32>
    %cst_22 = arith.constant dense<0.000000e+00> : vector<8xf32>
    %81 = vector.multi_reduction <add>, %80, %cst_22 [1] : vector<8x32xf32> to vector<8xf32>
    %82 = vector.shape_cast %81 : vector<8xf32> to vector<8x1xf32>
    %cst_23 = arith.constant 3.200000e+01 : f32
    %83 = vector.broadcast %cst_23 : f32 to vector<8x1xf32>
    %84 = arith.divf %82, %83 : vector<8x1xf32>
    %85 = vector.broadcast %84 : vector<8x1xf32> to vector<8x32xf32>
    %86 = arith.subf %80, %85 : vector<8x32xf32>
    %87 = arith.mulf %86, %86 : vector<8x32xf32>
    %cst_24 = arith.constant dense<0.000000e+00> : vector<8xf32>
    %88 = vector.multi_reduction <add>, %87, %cst_24 [1] : vector<8x32xf32> to vector<8xf32>
    %89 = vector.shape_cast %88 : vector<8xf32> to vector<8x1xf32>
    %cst_25 = arith.constant 3.200000e+01 : f32
    %90 = vector.broadcast %cst_25 : f32 to vector<8x1xf32>
    %91 = arith.divf %89, %90 : vector<8x1xf32>
    %92 = vector.broadcast %84 : vector<8x1xf32> to vector<8x32xf32>
    %93 = arith.subf %80, %92 : vector<8x32xf32>
    %cst_26 = arith.constant 9.99999974E-6 : f32
    %94 = vector.broadcast %cst_26 : f32 to vector<8x1xf32>
    %95 = arith.addf %91, %94 : vector<8x1xf32>
    %96 = math.rsqrt %95 : vector<8x1xf32>
    %97 = vector.broadcast %96 : vector<8x1xf32> to vector<8x32xf32>
    %98 = arith.mulf %93, %97 : vector<8x32xf32>
    %c0_27 = arith.constant 0 : index
    %c0_28 = arith.constant 0 : index
    %c0_29 = arith.constant 0 : index
    %99 = vector.load %arg8[%c0_27, %c0_28, %c0_29] : memref<1x1x32xf32, #tpu.memory_space<vmem>>, vector<1x1x32xf32>
    %100 = vector.shape_cast %99 : vector<1x1x32xf32> to vector<1x32xf32>
    %101 = vector.broadcast %100 : vector<1x32xf32> to vector<8x32xf32>
    %102 = arith.mulf %98, %101 : vector<8x32xf32>
    %c0_30 = arith.constant 0 : index
    %c0_31 = arith.constant 0 : index
    %c0_32 = arith.constant 0 : index
    %103 = vector.load %arg9[%c0_30, %c0_31, %c0_32] : memref<1x1x32xf32, #tpu.memory_space<vmem>>, vector<1x1x32xf32>
    %104 = vector.shape_cast %103 : vector<1x1x32xf32> to vector<1x32xf32>
    %105 = vector.broadcast %104 : vector<1x32xf32> to vector<8x32xf32>
    %106 = arith.addf %102, %105 : vector<8x32xf32>
    %107 = arith.truncf %106 : vector<8x32xf32> to vector<8x32xbf16>
    %c0_33 = arith.constant 0 : index
    %c0_34 = arith.constant 0 : index
    %c0_35 = arith.constant 0 : index
    %108 = vector.load %arg10[%c0_33, %c0_34, %c0_35] : memref<1x32x128xbf16, #tpu.memory_space<vmem>>, vector<1x32x128xbf16>
    %109 = vector.shape_cast %108 : vector<1x32x128xbf16> to vector<32x128xbf16>
    %cst_36 = arith.constant dense<0.000000e+00> : vector<8x128xf32>
    %110 = tpu.matmul %107, %109, %cst_36 {dimension_numbers = #tpu.dot_dimension_numbers<[1], [0], [0], [1], [0, 0, 1, 1], [], []>} : vector<8x32xbf16>, vector<32x128xbf16>, vector<8x128xf32> -> vector<8x128xf32>
    %c0_37 = arith.constant 0 : index
    %c0_38 = arith.constant 0 : index
    %c0_39 = arith.constant 0 : index
    %111 = vector.load %arg11[%c0_37, %c0_38, %c0_39] : memref<1x1x128xf32, #tpu.memory_space<vmem>>, vector<1x1x128xf32>
    %112 = vector.shape_cast %111 : vector<1x1x128xf32> to vector<1x128xf32>
    %113 = vector.broadcast %112 : vector<1x128xf32> to vector<8x128xf32>
    %114 = arith.addf %110, %113 : vector<8x128xf32>
    %115 = arith.mulf %114, %114 : vector<8x128xf32>
    %116 = arith.mulf %114, %115 : vector<8x128xf32>
    %cst_40 = arith.constant 4.471500e-02 : f32
    %117 = vector.broadcast %cst_40 : f32 to vector<8x128xf32>
    %118 = arith.mulf %117, %116 : vector<8x128xf32>
    %119 = arith.addf %114, %118 : vector<8x128xf32>
    %cst_41 = arith.constant 0.797884583 : f32
    %120 = vector.broadcast %cst_41 : f32 to vector<8x128xf32>
    %121 = arith.mulf %120, %119 : vector<8x128xf32>
    %122 = math.tanh %121 : vector<8x128xf32>
    %cst_42 = arith.constant 1.000000e+00 : f32
    %123 = vector.broadcast %cst_42 : f32 to vector<8x128xf32>
    %124 = arith.addf %123, %122 : vector<8x128xf32>
    %cst_43 = arith.constant 5.000000e-01 : f32
    %125 = vector.broadcast %cst_43 : f32 to vector<8x128xf32>
    %126 = arith.mulf %125, %124 : vector<8x128xf32>
    %127 = arith.mulf %114, %126 : vector<8x128xf32>
    %128 = arith.truncf %127 : vector<8x128xf32> to vector<8x128xbf16>
    %c0_44 = arith.constant 0 : index
    %c0_45 = arith.constant 0 : index
    %c0_46 = arith.constant 0 : index
    %129 = vector.load %arg12[%c0_44, %c0_45, %c0_46] : memref<1x128x32xbf16, #tpu.memory_space<vmem>>, vector<1x128x32xbf16>
    %130 = vector.shape_cast %129 : vector<1x128x32xbf16> to vector<128x32xbf16>
    %cst_47 = arith.constant dense<0.000000e+00> : vector<8x32xf32>
    %131 = tpu.matmul %128, %130, %cst_47 {dimension_numbers = #tpu.dot_dimension_numbers<[1], [0], [0], [1], [0, 0, 1, 1], [], []>} : vector<8x128xbf16>, vector<128x32xbf16>, vector<8x32xf32> -> vector<8x32xf32>
    %c0_48 = arith.constant 0 : index
    %c0_49 = arith.constant 0 : index
    %c0_50 = arith.constant 0 : index
    %132 = vector.load %arg13[%c0_48, %c0_49, %c0_50] : memref<1x1x32xf32, #tpu.memory_space<vmem>>, vector<1x1x32xf32>
    %133 = vector.shape_cast %132 : vector<1x1x32xf32> to vector<1x32xf32>
    %134 = vector.broadcast %133 : vector<1x32xf32> to vector<8x32xf32>
    %135 = arith.addf %131, %134 : vector<8x32xf32>
    %136 = arith.addf %106, %135 : vector<8x32xf32>
    %cst_51 = arith.constant dense<0.000000e+00> : vector<8xf32>
    %137 = vector.multi_reduction <add>, %136, %cst_51 [1] : vector<8x32xf32> to vector<8xf32>
    %138 = vector.shape_cast %137 : vector<8xf32> to vector<8x1xf32>
    %cst_52 = arith.constant 3.200000e+01 : f32
    %139 = vector.broadcast %cst_52 : f32 to vector<8x1xf32>
    %140 = arith.divf %138, %139 : vector<8x1xf32>
    %141 = vector.broadcast %140 : vector<8x1xf32> to vector<8x32xf32>
    %142 = arith.subf %136, %141 : vector<8x32xf32>
    %143 = arith.mulf %142, %142 : vector<8x32xf32>
    %cst_53 = arith.constant dense<0.000000e+00> : vector<8xf32>
    %144 = vector.multi_reduction <add>, %143, %cst_53 [1] : vector<8x32xf32> to vector<8xf32>
    %145 = vector.shape_cast %144 : vector<8xf32> to vector<8x1xf32>
    %cst_54 = arith.constant 3.200000e+01 : f32
    %146 = vector.broadcast %cst_54 : f32 to vector<8x1xf32>
    %147 = arith.divf %145, %146 : vector<8x1xf32>
    %148 = vector.broadcast %140 : vector<8x1xf32> to vector<8x32xf32>
    %149 = arith.subf %136, %148 : vector<8x32xf32>
    %cst_55 = arith.constant 9.99999974E-6 : f32
    %150 = vector.broadcast %cst_55 : f32 to vector<8x1xf32>
    %151 = arith.addf %147, %150 : vector<8x1xf32>
    %152 = math.rsqrt %151 : vector<8x1xf32>
    %153 = vector.broadcast %152 : vector<8x1xf32> to vector<8x32xf32>
    %154 = arith.mulf %149, %153 : vector<8x32xf32>
    %c0_56 = arith.constant 0 : index
    %c0_57 = arith.constant 0 : index
    %c0_58 = arith.constant 0 : index
    %155 = vector.load %arg14[%c0_56, %c0_57, %c0_58] : memref<1x1x32xf32, #tpu.memory_space<vmem>>, vector<1x1x32xf32>
    %156 = vector.shape_cast %155 : vector<1x1x32xf32> to vector<1x32xf32>
    %157 = vector.broadcast %156 : vector<1x32xf32> to vector<8x32xf32>
    %158 = arith.mulf %154, %157 : vector<8x32xf32>
    %c0_59 = arith.constant 0 : index
    %c0_60 = arith.constant 0 : index
    %c0_61 = arith.constant 0 : index
    %159 = vector.load %arg15[%c0_59, %c0_60, %c0_61] : memref<1x1x32xf32, #tpu.memory_space<vmem>>, vector<1x1x32xf32>
    %160 = vector.shape_cast %159 : vector<1x1x32xf32> to vector<1x32xf32>
    %161 = vector.broadcast %160 : vector<1x32xf32> to vector<8x32xf32>
    %162 = arith.addf %158, %161 : vector<8x32xf32>
    %c0_62 = arith.constant 0 : index
    %c0_63 = arith.constant 0 : index
    %163 = vector.load %arg17[%c0_62, %c0_63] : memref<8x32xf32, #tpu.memory_space<vmem>>, vector<8x32xf32>
    tpu.vector_store %arg17[%c0_62, %c0_63], %162 {strides = array<i32>} : memref<8x32xf32, #tpu.memory_space<vmem>>, vector<8x32xf32>,
    %c1_i32 = arith.constant 1 : i32
    %164 = arith.cmpi eq, %arg1, %c1_i32 : i32
    %165 = arith.extui %164 : i1 to i32
    %c0_i32_64 = arith.constant 0 : i32
    %166 = arith.cmpi ne, %165, %c0_i32_64 : i32
    scf.if %166 {
      %c0_65 = arith.constant 0 : index
      %c0_66 = arith.constant 0 : index
      %c0_67 = arith.constant 0 : index
      %167 = vector.load %arg16[%c0_65, %c0_66, %c0_67] : memref<1x8x32xf32, #tpu.memory_space<vmem>>, vector<1x8x32xf32>
      %168 = vector.shape_cast %167 : vector<1x8x32xf32> to vector<8x32xf32>
      %169 = vector.shape_cast %162 : vector<8x32xf32> to vector<1x8x32xf32>
      tpu.vector_store %arg16[%c0_65, %c0_66, %c0_67], %169 {strides = array<i32>} : memref<1x8x32xf32, #tpu.memory_space<vmem>>, vector<1x8x32xf32>,
    } else {
    }
    return
  }
  func.func @transform_0(%arg0: i32, %arg1: i32) -> (i32, i32, i32) {
    %c0_i32 = arith.constant 0 : i32
    %c0_i32_0 = arith.constant 0 : i32
    %c0_i32_1 = arith.constant 0 : i32
    return %arg0, %c0_i32, %c0_i32_0 : i32, i32, i32
  }
  func.func @transform_1(%arg0: i32, %arg1: i32) -> (i32, i32, i32) {
    %c0_i32 = arith.constant 0 : i32
    %c0_i32_0 = arith.constant 0 : i32
    %c0_i32_1 = arith.constant 0 : i32
    return %arg0, %c0_i32, %c0_i32_0 : i32, i32, i32
  }
  func.func @transform_2(%arg0: i32, %arg1: i32) -> (i32, i32, i32) {
    %c0_i32 = arith.constant 0 : i32
    %c0_i32_0 = arith.constant 0 : i32
    %c0_i32_1 = arith.constant 0 : i32
    return %arg1, %c0_i32, %c0_i32_0 : i32, i32, i32
  }
  func.func @transform_3(%arg0: i32, %arg1: i32) -> (i32, i32, i32) {
    %c0_i32 = arith.constant 0 : i32
    %c0_i32_0 = arith.constant 0 : i32
    %c0_i32_1 = arith.constant 0 : i32
    return %arg1, %c0_i32, %c0_i32_0 : i32, i32, i32
  }
  func.func @transform_4(%arg0: i32, %arg1: i32) -> (i32, i32, i32) {
    %c0_i32 = arith.constant 0 : i32
    %c0_i32_0 = arith.constant 0 : i32
    %c0_i32_1 = arith.constant 0 : i32
    return %arg1, %c0_i32, %c0_i32_0 : i32, i32, i32
  }
  func.func @transform_5(%arg0: i32, %arg1: i32) -> (i32, i32, i32) {
    %c0_i32 = arith.constant 0 : i32
    %c0_i32_0 = arith.constant 0 : i32
    %c0_i32_1 = arith.constant 0 : i32
    return %arg1, %c0_i32, %c0_i32_0 : i32, i32, i32
  }
  func.func @transform_6(%arg0: i32, %arg1: i32) -> (i32, i32, i32) {
    %c0_i32 = arith.constant 0 : i32
    %c0_i32_0 = arith.constant 0 : i32
    %c0_i32_1 = arith.constant 0 : i32
    return %arg1, %c0_i32, %c0_i32_0 : i32, i32, i32
  }
  func.func @transform_7(%arg0: i32, %arg1: i32) -> (i32, i32, i32) {
    %c0_i32 = arith.constant 0 : i32
    %c0_i32_0 = arith.constant 0 : i32
    %c0_i32_1 = arith.constant 0 : i32
    return %arg1, %c0_i32, %c0_i32_0 : i32, i32, i32
  }
  func.func @transform_8(%arg0: i32, %arg1: i32) -> (i32, i32, i32) {
    %c0_i32 = arith.constant 0 : i32
    %c0_i32_0 = arith.constant 0 : i32
    %c0_i32_1 = arith.constant 0 : i32
    return %arg1, %c0_i32, %c0_i32_0 : i32, i32, i32
  }
  func.func @transform_9(%arg0: i32, %arg1: i32) -> (i32, i32, i32) {
    %c0_i32 = arith.constant 0 : i32
    %c0_i32_0 = arith.constant 0 : i32
    %c0_i32_1 = arith.constant 0 : i32
    return %arg1, %c0_i32, %c0_i32_0 : i32, i32, i32
  }
  func.func @transform_10(%arg0: i32, %arg1: i32) -> (i32, i32, i32) {
    %c0_i32 = arith.constant 0 : i32
    %c0_i32_0 = arith.constant 0 : i32
    %c0_i32_1 = arith.constant 0 : i32
    return %arg1, %c0_i32, %c0_i32_0 : i32, i32, i32
  }
  func.func @transform_11(%arg0: i32, %arg1: i32) -> (i32, i32, i32) {
    %c0_i32 = arith.constant 0 : i32
    %c0_i32_0 = arith.constant 0 : i32
    %c0_i32_1 = arith.constant 0 : i32
    return %arg1, %c0_i32, %c0_i32_0 : i32, i32, i32
  }
  func.func @transform_12(%arg0: i32, %arg1: i32) -> (i32, i32, i32) {
    %c0_i32 = arith.constant 0 : i32
    %c0_i32_0 = arith.constant 0 : i32
    %c0_i32_1 = arith.constant 0 : i32
    return %arg1, %c0_i32, %c0_i32_0 : i32, i32, i32
  }
  func.func @transform_13(%arg0: i32, %arg1: i32) -> (i32, i32, i32) {
    %c0_i32 = arith.constant 0 : i32
    %c0_i32_0 = arith.constant 0 : i32
    %c0_i32_1 = arith.constant 0 : i32
    return %arg1, %c0_i32, %c0_i32_0 : i32, i32, i32
  }
  func.func @transform_14(%arg0: i32, %arg1: i32) -> (i32, i32, i32) {
    %c0_i32 = arith.constant 0 : i32
    %c0_i32_0 = arith.constant 0 : i32
    %c0_i32_1 = arith.constant 0 : i32
    return %arg0, %c0_i32, %c0_i32_0 : i32, i32, i32
  }
}

</mosaic_0001>

<llo_original>
// kernel: tpu_custom_call.1
$region0: #{tpu_custom_call.1}
  #allocation0 [shape = 'u32[]', space=smem, size = 0x4, offset = 0x4, fixed_abs, tag = 'smem constant byte address 0x4 - core index']
  #allocation1 [shape = 'u32[144,128]{1,0:T(1,128)}', space=vmem, size = 0x12000, scoped, tag = 'internal scratch']
  #allocation2 [shape = 'f32[8,32]{1,0:T(8,128)}', space=vmem, size = 0x1000, scoped, tag = 'scratch operand']
  %s0 = inlined_call_operand.vmem [shape: f32[2,8,32], index: 0, kind: input, shape index: {}]
  %s1 = inlined_call_operand.vmem [shape: f32[2,1,8], index: 1, kind: input, shape index: {}]
  %s2 = inlined_call_operand.vmem [shape: bf16[2,32,96], index: 2, kind: input, shape index: {}]
  %s3 = inlined_call_operand.vmem [shape: f32[2,1,96], index: 3, kind: input, shape index: {}]
  %s4 = inlined_call_operand.vmem [shape: bf16[2,32,32], index: 4, kind: input, shape index: {}]
  %s5 = inlined_call_operand.vmem [shape: f32[2,1,32], index: 5, kind: input, shape index: {}]
  %s6 = inlined_call_operand.vmem [shape: f32[2,1,32], index: 6, kind: input, shape index: {}]
  %s7 = inlined_call_operand.vmem [shape: f32[2,1,32], index: 7, kind: input, shape index: {}]
  %s8 = inlined_call_operand.vmem [shape: bf16[2,32,128], index: 8, kind: input, shape index: {}]
  %s9 = inlined_call_operand.vmem [shape: f32[2,1,128], index: 9, kind: input, shape index: {}]
  %s10 = inlined_call_operand.vmem [shape: bf16[2,128,32], index: 10, kind: input, shape index: {}]
  %s11 = inlined_call_operand.vmem [shape: f32[2,1,32], index: 11, kind: input, shape index: {}]
  %s12 = inlined_call_operand.vmem [shape: f32[2,1,32], index: 12, kind: input, shape index: {}]
  %s13 = inlined_call_operand.vmem [shape: f32[2,1,32], index: 13, kind: input, shape index: {}]
  %s14 = inlined_call_operand.hbm [shape: f32[2,8,32], index: 14, kind: output, shape index: {}]
  %s15 = sld [smem:[#allocation0]]
  $region97: #{tpu_custom_call.1} parent=0
    _
  %s17 = ssub.s32 1, %s15
  %s18 = scalar_select 0, %s17, %s15
  $region1: #{tpu_custom_call.1} parent=0
    #allocation3 [shape = 'u8[8192]{0}', space=vmem, size = 0x2000, scoped, tag = 'output window, operand 0']
    #allocation4 [shape = 's32[2]{0}', space=sflag, size = 0x8, scoped, tag = 'scoped memory for tpu_custom_call.1']
    %19 = vsyncpa [#allocation4], 0
    %s20 = scalar_lea.sflag [#allocation4], 1
    %21 = vsyncpa %s20, 0
    loop: start=0, step=1, limit=6
    $region2: #{tpu_custom_call.1} parent=1 // loop_pre_header
      _
    $region3: #{tpu_custom_call.1} parent=1 // loop_header
      %s23 = sphi 0, %s27
      %p24 = scmp.ge.s32.totalorder %s23, 6
      %s30 = sphi 0, %s42
      %s31 = sphi 0, %s38
      %s32 = sphi 0, %s30
      %s33 = sphi 0, %s31
      %s34 = sphi 0, %s32
      %s35 = sphi 0, %s33
      %s45 = sphi 0, %s47
      %s48 = sphi 0, %s45
      %s49 = sphi 0, %s48
      %s65 = sphi 0, %s49
      %s71 = sphi 0, %s73
      %s74 = sphi 0, %s71
      %s75 = sphi 0, %s74
      %s91 = sphi 0, %s75
      %s97 = sphi 0, %s99
      %s100 = sphi 0, %s97
      %s101 = sphi 0, %s100
      %s117 = sphi 0, %s101
      %s123 = sphi 0, %s125
      %s126 = sphi 0, %s123
      %s127 = sphi 0, %s126
      %s143 = sphi 0, %s127
      %s149 = sphi 0, %s151
      %s152 = sphi 0, %s149
      %s153 = sphi 0, %s152
      %s169 = sphi 0, %s153
      %s175 = sphi 0, %s177
      %s178 = sphi 0, %s175
      %s179 = sphi 0, %s178
      %s195 = sphi 0, %s179
      %s201 = sphi 0, %s203
      %s204 = sphi 0, %s201
      %s205 = sphi 0, %s204
      %s221 = sphi 0, %s205
      %s227 = sphi 0, %s229
      %s230 = sphi 0, %s227
      %s231 = sphi 0, %s230
      %s247 = sphi 0, %s231
      %s253 = sphi 0, %s255
      %s256 = sphi 0, %s253
      %s257 = sphi 0, %s256
      %s273 = sphi 0, %s257
      %s279 = sphi 0, %s281
      %s282 = sphi 0, %s279
      %s283 = sphi 0, %s282
      %s299 = sphi 0, %s283
      %s305 = sphi 0, %s307
      %s308 = sphi 0, %s305
      %s309 = sphi 0, %s308
      %s325 = sphi 0, %s309
      %s331 = sphi 0, %s333
      %s334 = sphi 0, %s331
      %s335 = sphi 0, %s334
      %s351 = sphi 0, %s335
      %s357 = sphi 0, %s359
      %s360 = sphi 0, %s357
      %s361 = sphi 0, %s360
      %s377 = sphi 0, %s361
      %s383 = sphi 0, %s385
      %s386 = sphi 0, %s383
      %s387 = sphi 0, %s386
      %s403 = sphi 0, %s387
      %s409 = sphi 0, %s411
      %s412 = sphi 0, %s409
      %s413 = sphi 0, %s412
      %s429 = sphi 0, %s413
    $region4: #{tpu_custom_call.1} parent=1 // loop_header_branch
      %26 = sbr.rel (%p24) target = $region8
    $region5: #{tpu_custom_call.1} parent=1 // loop_body
      %s28 = ssub.s32 %s23, 1
      %s29 = ssub.s32 %s23, 2
      %s36 = sadd.s32 1, %s31
      %p37 = scmp.ge.s32.totalorder %s36, 2
      %s38 = scalar_select %p37, 0, %s36
      %s39 = sadd.s32 1, %s30
      %s40 = scalar_select %p37, %s39, %s30
      %p41 = scmp.ge.s32.totalorder %s40, 2
      %s42 = scalar_select %p41, 0, %s40
      %s43 = ssub.s32 %s30, %s42
      %p44 = scmp.eq.s32.totalorder %s43, 0
      %s46 = sadd.s32 %s45, 1
      %s47 = scalar_select %p44, %s45, %s46
      %p50 = pneg %p44
      %p51 = scmp.eq.s32.totalorder %s23, 3
      %p52 = por %p50, %p51
      %p53 = scmp.ne.s32.totalorder %s45, %s48
      %p54 = scmp.eq.s32.totalorder %s23, 0
      %p55 = por %p53, %p54
      %p56 = scmp.ne.s32.totalorder %s45, %s48
      %p57 = scmp.eq.s32.totalorder %s28, 3
      %p58 = por %p56, %p57
      %p59 = scmp.ne.s32.totalorder %s48, %s49
      %p60 = scmp.eq.s32.totalorder %s28, 0
      %p61 = por %p59, %p60
      %p62 = scmp.ne.s32.totalorder %s48, %s49
      %p63 = scmp.eq.s32.totalorder %s29, 3
      %p64 = por %p62, %p63
      %p66 = scmp.ne.s32.totalorder %s49, %s65
      %p67 = scmp.eq.s32.totalorder %s29, 0
      %p68 = por %p66, %p67
      %s69 = ssub.s32 %s30, %s42
      %p70 = scmp.eq.s32.totalorder %s69, 0
      %s72 = sadd.s32 %s71, 1
      %s73 = scalar_select %p70, %s71, %s72
      %p76 = pneg %p70
      %p77 = scmp.eq.s32.totalorder %s23, 3
      %p78 = por %p76, %p77
      %p79 = scmp.ne.s32.totalorder %s71, %s74
      %p80 = scmp.eq.s32.totalorder %s23, 0
      %p81 = por %p79, %p80
      %p82 = scmp.ne.s32.totalorder %s71, %s74
      %p83 = scmp.eq.s32.totalorder %s28, 3
      %p84 = por %p82, %p83
      %p85 = scmp.ne.s32.totalorder %s74, %s75
      %p86 = scmp.eq.s32.totalorder %s28, 0
      %p87 = por %p85, %p86
      %p88 = scmp.ne.s32.totalorder %s74, %s75
      %p89 = scmp.eq.s32.totalorder %s29, 3
      %p90 = por %p88, %p89
      %p92 = scmp.ne.s32.totalorder %s75, %s91
      %p93 = scmp.eq.s32.totalorder %s29, 0
      %p94 = por %p92, %p93
      %s95 = ssub.s32 %s31, %s38
      %p96 = scmp.eq.s32.totalorder %s95, 0
      %s98 = sadd.s32 %s97, 1
      %s99 = scalar_select %p96, %s97, %s98
      %p102 = pneg %p96
      %p103 = scmp.eq.s32.totalorder %s23, 3
      %p104 = por %p102, %p103
      %p105 = scmp.ne.s32.totalorder %s97, %s100
      %p106 = scmp.eq.s32.totalorder %s23, 0
      %p107 = por %p105, %p106
      %p108 = scmp.ne.s32.totalorder %s97, %s100
      %p109 = scmp.eq.s32.totalorder %s28, 3
      %p110 = por %p108, %p109
      %p111 = scmp.ne.s32.totalorder %s100, %s101
      %p112 = scmp.eq.s32.totalorder %s28, 0
      %p113 = por %p111, %p112
      %p114 = scmp.ne.s32.totalorder %s100, %s101
      %p115 = scmp.eq.s32.totalorder %s29, 3
      %p116 = por %p114, %p115
      %p118 = scmp.ne.s32.totalorder %s101, %s117
      %p119 = scmp.eq.s32.totalorder %s29, 0
      %p120 = por %p118, %p119
      %s121 = ssub.s32 %s31, %s38
      %p122 = scmp.eq.s32.totalorder %s121, 0
      %s124 = sadd.s32 %s123, 1
      %s125 = scalar_select %p122, %s123, %s124
      %p128 = pneg %p122
      %p129 = scmp.eq.s32.totalorder %s23, 3
      %p130 = por %p128, %p129
      %p131 = scmp.ne.s32.totalorder %s123, %s126
      %p132 = scmp.eq.s32.totalorder %s23, 0
      %p133 = por %p131, %p132
      %p134 = scmp.ne.s32.totalorder %s123, %s126
      %p135 = scmp.eq.s32.totalorder %s28, 3
      %p136 = por %p134, %p135
      %p137 = scmp.ne.s32.totalorder %s126, %s127
      %p138 = scmp.eq.s32.totalorder %s28, 0
      %p139 = por %p137, %p138
      %p140 = scmp.ne.s32.totalorder %s126, %s127
      %p141 = scmp.eq.s32.totalorder %s29, 3
      %p142 = por %p140, %p141
      %p144 = scmp.ne.s32.totalorder %s127, %s143
      %p145 = scmp.eq.s32.totalorder %s29, 0
      %p146 = por %p144, %p145
      %s147 = ssub.s32 %s31, %s38
      %p148 = scmp.eq.s32.totalorder %s147, 0
      %s150 = sadd.s32 %s149, 1
      %s151 = scalar_select %p148, %s149, %s150
      %p154 = pneg %p148
      %p155 = scmp.eq.s32.totalorder %s23, 3
      %p156 = por %p154, %p155
      %p157 = scmp.ne.s32.totalorder %s149, %s152
      %p158 = scmp.eq.s32.totalorder %s23, 0
      %p159 = por %p157, %p158
      %p160 = scmp.ne.s32.totalorder %s149, %s152
      %p161 = scmp.eq.s32.totalorder %s28, 3
      %p162 = por %p160, %p161
      %p163 = scmp.ne.s32.totalorder %s152, %s153
      %p164 = scmp.eq.s32.totalorder %s28, 0
      %p165 = por %p163, %p164
      %p166 = scmp.ne.s32.totalorder %s152, %s153
      %p167 = scmp.eq.s32.totalorder %s29, 3
      %p168 = por %p166, %p167
      %p170 = scmp.ne.s32.totalorder %s153, %s169
      %p171 = scmp.eq.s32.totalorder %s29, 0
      %p172 = por %p170, %p171
      %s173 = ssub.s32 %s31, %s38
      %p174 = scmp.eq.s32.totalorder %s173, 0
      %s176 = sadd.s32 %s175, 1
      %s177 = scalar_select %p174, %s175, %s176
      %p180 = pneg %p174
      %p181 = scmp.eq.s32.totalorder %s23, 3
      %p182 = por %p180, %p181
      %p183 = scmp.ne.s32.totalorder %s175, %s178
      %p184 = scmp.eq.s32.totalorder %s23, 0
      %p185 = por %p183, %p184
      %p186 = scmp.ne.s32.totalorder %s175, %s178
      %p187 = scmp.eq.s32.totalorder %s28, 3
      %p188 = por %p186, %p187
      %p189 = scmp.ne.s32.totalorder %s178, %s179
      %p190 = scmp.eq.s32.totalorder %s28, 0
      %p191 = por %p189, %p190
      %p192 = scmp.ne.s32.totalorder %s178, %s179
      %p193 = scmp.eq.s32.totalorder %s29, 3
      %p194 = por %p192, %p193
      %p196 = scmp.ne.s32.totalorder %s179, %s195
      %p197 = scmp.eq.s32.totalorder %s29, 0
      %p198 = por %p196, %p197
      %s199 = ssub.s32 %s31, %s38
      %p200 = scmp.eq.s32.totalorder %s199, 0
      %s202 = sadd.s32 %s201, 1
      %s203 = scalar_select %p200, %s201, %s202
      %p206 = pneg %p200
      %p207 = scmp.eq.s32.totalorder %s23, 3
      %p208 = por %p206, %p207
      %p209 = scmp.ne.s32.totalorder %s201, %s204
      %p210 = scmp.eq.s32.totalorder %s23, 0
      %p211 = por %p209, %p210
      %p212 = scmp.ne.s32.totalorder %s201, %s204
      %p213 = scmp.eq.s32.totalorder %s28, 3
      %p214 = por %p212, %p213
      %p215 = scmp.ne.s32.totalorder %s204, %s205
      %p216 = scmp.eq.s32.totalorder %s28, 0
      %p217 = por %p215, %p216
      %p218 = scmp.ne.s32.totalorder %s204, %s205
      %p219 = scmp.eq.s32.totalorder %s29, 3
      %p220 = por %p218, %p219
      %p222 = scmp.ne.s32.totalorder %s205, %s221
      %p223 = scmp.eq.s32.totalorder %s29, 0
      %p224 = por %p222, %p223
      %s225 = ssub.s32 %s31, %s38
      %p226 = scmp.eq.s32.totalorder %s225, 0
      %s228 = sadd.s32 %s227, 1
      %s229 = scalar_select %p226, %s227, %s228
      %p232 = pneg %p226
      %p233 = scmp.eq.s32.totalorder %s23, 3
      %p234 = por %p232, %p233
      %p235 = scmp.ne.s32.totalorder %s227, %s230
      %p236 = scmp.eq.s32.totalorder %s23, 0
      %p237 = por %p235, %p236
      %p238 = scmp.ne.s32.totalorder %s227, %s230
      %p239 = scmp.eq.s32.totalorder %s28, 3
      %p240 = por %p238, %p239
      %p241 = scmp.ne.s32.totalorder %s230, %s231
      %p242 = scmp.eq.s32.totalorder %s28, 0
      %p243 = por %p241, %p242
      %p244 = scmp.ne.s32.totalorder %s230, %s231
      %p245 = scmp.eq.s32.totalorder %s29, 3
      %p246 = por %p244, %p245
      %p248 = scmp.ne.s32.totalorder %s231, %s247
      %p249 = scmp.eq.s32.totalorder %s29, 0
      %p250 = por %p248, %p249
      %s251 = ssub.s32 %s31, %s38
      %p252 = scmp.eq.s32.totalorder %s251, 0
      %s254 = sadd.s32 %s253, 1
      %s255 = scalar_select %p252, %s253, %s254
      %p258 = pneg %p252
      %p259 = scmp.eq.s32.totalorder %s23, 3
      %p260 = por %p258, %p259
      %p261 = scmp.ne.s32.totalorder %s253, %s256
      %p262 = scmp.eq.s32.totalorder %s23, 0
      %p263 = por %p261, %p262
      %p264 = scmp.ne.s32.totalorder %s253, %s256
      %p265 = scmp.eq.s32.totalorder %s28, 3
      %p266 = por %p264, %p265
      %p267 = scmp.ne.s32.totalorder %s256, %s257
      %p268 = scmp.eq.s32.totalorder %s28, 0
      %p269 = por %p267, %p268
      %p270 = scmp.ne.s32.totalorder %s256, %s257
      %p271 = scmp.eq.s32.totalorder %s29, 3
      %p272 = por %p270, %p271
      %p274 = scmp.ne.s32.totalorder %s257, %s273
      %p275 = scmp.eq.s32.totalorder %s29, 0
      %p276 = por %p274, %p275
      %s277 = ssub.s32 %s31, %s38
      %p278 = scmp.eq.s32.totalorder %s277, 0
      %s280 = sadd.s32 %s279, 1
      %s281 = scalar_select %p278, %s279, %s280
      %p284 = pneg %p278
      %p285 = scmp.eq.s32.totalorder %s23, 3
      %p286 = por %p284, %p285
      %p287 = scmp.ne.s32.totalorder %s279, %s282
      %p288 = scmp.eq.s32.totalorder %s23, 0
      %p289 = por %p287, %p288
      %p290 = scmp.ne.s32.totalorder %s279, %s282
      %p291 = scmp.eq.s32.totalorder %s28, 3
      %p292 = por %p290, %p291
      %p293 = scmp.ne.s32.totalorder %s282, %s283
      %p294 = scmp.eq.s32.totalorder %s28, 0
      %p295 = por %p293, %p294
      %p296 = scmp.ne.s32.totalorder %s282, %s283
      %p297 = scmp.eq.s32.totalorder %s29, 3
      %p298 = por %p296, %p297
      %p300 = scmp.ne.s32.totalorder %s283, %s299
      %p301 = scmp.eq.s32.totalorder %s29, 0
      %p302 = por %p300, %p301
      %s303 = ssub.s32 %s31, %s38
      %p304 = scmp.eq.s32.totalorder %s303, 0
      %s306 = sadd.s32 %s305, 1
      %s307 = scalar_select %p304, %s305, %s306
      %p310 = pneg %p304
      %p311 = scmp.eq.s32.totalorder %s23, 3
      %p312 = por %p310, %p311
      %p313 = scmp.ne.s32.totalorder %s305, %s308
      %p314 = scmp.eq.s32.totalorder %s23, 0
      %p315 = por %p313, %p314
      %p316 = scmp.ne.s32.totalorder %s305, %s308
      %p317 = scmp.eq.s32.totalorder %s28, 3
      %p318 = por %p316, %p317
      %p319 = scmp.ne.s32.totalorder %s308, %s309
      %p320 = scmp.eq.s32.totalorder %s28, 0
      %p321 = por %p319, %p320
      %p322 = scmp.ne.s32.totalorder %s308, %s309
      %p323 = scmp.eq.s32.totalorder %s29, 3
      %p324 = por %p322, %p323
      %p326 = scmp.ne.s32.totalorder %s309, %s325
      %p327 = scmp.eq.s32.totalorder %s29, 0
      %p328 = por %p326, %p327
      %s329 = ssub.s32 %s31, %s38
      %p330 = scmp.eq.s32.totalorder %s329, 0
      %s332 = sadd.s32 %s331, 1
      %s333 = scalar_select %p330, %s331, %s332
      %p336 = pneg %p330
      %p337 = scmp.eq.s32.totalorder %s23, 3
      %p338 = por %p336, %p337
      %p339 = scmp.ne.s32.totalorder %s331, %s334
      %p340 = scmp.eq.s32.totalorder %s23, 0
      %p341 = por %p339, %p340
      %p342 = scmp.ne.s32.totalorder %s331, %s334
      %p343 = scmp.eq.s32.totalorder %s28, 3
      %p344 = por %p342, %p343
      %p345 = scmp.ne.s32.totalorder %s334, %s335
      %p346 = scmp.eq.s32.totalorder %s28, 0
      %p347 = por %p345, %p346
      %p348 = scmp.ne.s32.totalorder %s334, %s335
      %p349 = scmp.eq.s32.totalorder %s29, 3
      %p350 = por %p348, %p349
      %p352 = scmp.ne.s32.totalorder %s335, %s351
      %p353 = scmp.eq.s32.totalorder %s29, 0
      %p354 = por %p352, %p353
      %s355 = ssub.s32 %s31, %s38
      %p356 = scmp.eq.s32.totalorder %s355, 0
      %s358 = sadd.s32 %s357, 1
      %s359 = scalar_select %p356, %s357, %s358
      %p362 = pneg %p356
      %p363 = scmp.eq.s32.totalorder %s23, 3
      %p364 = por %p362, %p363
      %p365 = scmp.ne.s32.totalorder %s357, %s360
      %p366 = scmp.eq.s32.totalorder %s23, 0
      %p367 = por %p365, %p366
      %p368 = scmp.ne.s32.totalorder %s357, %s360
      %p369 = scmp.eq.s32.totalorder %s28, 3
      %p370 = por %p368, %p369
      %p371 = scmp.ne.s32.totalorder %s360, %s361
      %p372 = scmp.eq.s32.totalorder %s28, 0
      %p373 = por %p371, %p372
      %p374 = scmp.ne.s32.totalorder %s360, %s361
      %p375 = scmp.eq.s32.totalorder %s29, 3
      %p376 = por %p374, %p375
      %p378 = scmp.ne.s32.totalorder %s361, %s377
      %p379 = scmp.eq.s32.totalorder %s29, 0
      %p380 = por %p378, %p379
      %s381 = ssub.s32 %s31, %s38
      %p382 = scmp.eq.s32.totalorder %s381, 0
      %s384 = sadd.s32 %s383, 1
      %s385 = scalar_select %p382, %s383, %s384
      %p388 = pneg %p382
      %p389 = scmp.eq.s32.totalorder %s23, 3
      %p390 = por %p388, %p389
      %p391 = scmp.ne.s32.totalorder %s383, %s386
      %p392 = scmp.eq.s32.totalorder %s23, 0
      %p393 = por %p391, %p392
      %p394 = scmp.ne.s32.totalorder %s383, %s386
      %p395 = scmp.eq.s32.totalorder %s28, 3
      %p396 = por %p394, %p395
      %p397 = scmp.ne.s32.totalorder %s386, %s387
      %p398 = scmp.eq.s32.totalorder %s28, 0
      %p399 = por %p397, %p398
      %p400 = scmp.ne.s32.totalorder %s386, %s387
      %p401 = scmp.eq.s32.totalorder %s29, 3
      %p402 = por %p400, %p401
      %p404 = scmp.ne.s32.totalorder %s387, %s403
      %p405 = scmp.eq.s32.totalorder %s29, 0
      %p406 = por %p404, %p405
      %s407 = ssub.s32 %s30, %s42
      %p408 = scmp.eq.s32.totalorder %s407, 0
      %s410 = sadd.s32 %s409, 1
      %s411 = scalar_select %p408, %s409, %s410
      %p414 = pneg %p408
      %p415 = scmp.eq.s32.totalorder %s23, 3
      %p416 = por %p414, %p415
      %p417 = scmp.ne.s32.totalorder %s409, %s412
      %p418 = scmp.eq.s32.totalorder %s23, 0
      %p419 = por %p417, %p418
      %p420 = scmp.ne.s32.totalorder %s409, %s412
      %p421 = scmp.eq.s32.totalorder %s28, 3
      %p422 = por %p420, %p421
      %p423 = scmp.ne.s32.totalorder %s412, %s413
      %p424 = scmp.eq.s32.totalorder %s28, 0
      %p425 = por %p423, %p424
      %p426 = scmp.ne.s32.totalorder %s412, %s413
      %p427 = scmp.eq.s32.totalorder %s29, 3
      %p428 = por %p426, %p427
      %p430 = scmp.ne.s32.totalorder %s413, %s429
      %p431 = scmp.eq.s32.totalorder %s29, 0
      %p432 = por %p430, %p431
      %p433 = scmp.le.s32.totalorder 1, %s23
      %p434 = scmp.lt.s32.totalorder %s23, 5
      %p435 = pnand %p433, %p434
      %p436 = pneg %p435
      // Predicated region
      $region9: #{tpu_custom_call.1} parent=5 // pred_check
        _
      $region10: #{tpu_custom_call.1} parent=5 // pred_check_branch
        %438 = sbr.rel (%p435) target = $region12
      $region11: #{tpu_custom_call.1} parent=5 // pred_region
        %s439 = ssub.s32 %s23, 1
      $region12: #{tpu_custom_call.1} parent=5 // pred_fallthru
        _
      %p440 = scmp.lt.s32.totalorder %s23, 4
      // Predicated region
      $region13: #{tpu_custom_call.1} parent=5 // pred_check
        %p441 = pneg %p440
      $region14: #{tpu_custom_call.1} parent=5 // pred_check_branch
        %443 = sbr.rel (%p441) target = $region16
      $region15: #{tpu_custom_call.1} parent=5 // pred_region
        // Predicated region
        $region17: #{tpu_custom_call.1} parent=15 // pred_check
          %p444 = pneg %p55
        $region18: #{tpu_custom_call.1} parent=15 // pred_check_branch
          %446 = sbr.rel (%p444) target = $region20
        $region19: #{tpu_custom_call.1} parent=15 // pred_region
          %p447 = scmp.lt.s32.totalorder %s30, 1
          %s448 = scalar_select %p447, %s30, 1
          %s449 = smul.addr %s448, 8
          %s450 = scalar_lea.vmem %s0, %s449
        $region20: #{tpu_custom_call.1} parent=15 // pred_fallthru
          _
        // Predicated region
        $region21: #{tpu_custom_call.1} parent=15 // pred_check
          %p451 = pneg %p81
        $region22: #{tpu_custom_call.1} parent=15 // pred_check_branch
          %453 = sbr.rel (%p451) target = $region24
        $region23: #{tpu_custom_call.1} parent=15 // pred_region
          %p454 = scmp.lt.s32.totalorder %s30, 1
          %s455 = scalar_select %p454, %s30, 1
          %s456 = scalar_lea.vmem %s1, %s455
        $region24: #{tpu_custom_call.1} parent=15 // pred_fallthru
          _
        // Predicated region
        $region25: #{tpu_custom_call.1} parent=15 // pred_check
          %p457 = pneg %p107
        $region26: #{tpu_custom_call.1} parent=15 // pred_check_branch
          %459 = sbr.rel (%p457) target = $region28
        $region27: #{tpu_custom_call.1} parent=15 // pred_region
          %p460 = scmp.lt.s32.totalorder %s31, 1
          %s461 = scalar_select %p460, %s31, 1
          %s462 = smul.addr %s461, 4
          %s463 = smul.addr %s462, 4
          %s464 = scalar_lea.vmem %s2, %s463
        $region28: #{tpu_custom_call.1} parent=15 // pred_fallthru
          _
        // Predicated region
        $region29: #{tpu_custom_call.1} parent=15 // pred_check
          %p465 = pneg %p133
        $region30: #{tpu_custom_call.1} parent=15 // pred_check_branch
          %467 = sbr.rel (%p465) target = $region32
        $region31: #{tpu_custom_call.1} parent=15 // pred_region
          %p468 = scmp.lt.s32.totalorder %s31, 1
          %s469 = scalar_select %p468, %s31, 1
          %s470 = scalar_lea.vmem %s3, %s469
        $region32: #{tpu_custom_call.1} parent=15 // pred_fallthru
          _
        // Predicated region
        $region33: #{tpu_custom_call.1} parent=15 // pred_check
          %p471 = pneg %p159
        $region34: #{tpu_custom_call.1} parent=15 // pred_check_branch
          %473 = sbr.rel (%p471) target = $region36
        $region35: #{tpu_custom_call.1} parent=15 // pred_region
          %p474 = scmp.lt.s32.totalorder %s31, 1
          %s475 = scalar_select %p474, %s31, 1
          %s476 = smul.addr %s475, 4
          %s477 = smul.addr %s476, 4
          %s478 = scalar_lea.vmem %s4, %s477
        $region36: #{tpu_custom_call.1} parent=15 // pred_fallthru
          _
        // Predicated region
        $region37: #{tpu_custom_call.1} parent=15 // pred_check
          %p479 = pneg %p185
        $region38: #{tpu_custom_call.1} parent=15 // pred_check_branch
          %481 = sbr.rel (%p479) target = $region40
        $region39: #{tpu_custom_call.1} parent=15 // pred_region
          %p482 = scmp.lt.s32.totalorder %s31, 1
          %s483 = scalar_select %p482, %s31, 1
          %s484 = scalar_lea.vmem %s5, %s483
        $region40: #{tpu_custom_call.1} parent=15 // pred_fallthru
          _
        // Predicated region
        $region41: #{tpu_custom_call.1} parent=15 // pred_check
          %p485 = pneg %p211
        $region42: #{tpu_custom_call.1} parent=15 // pred_check_branch
          %487 = sbr.rel (%p485) target = $region44
        $region43: #{tpu_custom_call.1} parent=15 // pred_region
          %p488 = scmp.lt.s32.totalorder %s31, 1
          %s489 = scalar_select %p488, %s31, 1
          %s490 = scalar_lea.vmem %s6, %s489
        $region44: #{tpu_custom_call.1} parent=15 // pred_fallthru
          _
        // Predicated region
        $region45: #{tpu_custom_call.1} parent=15 // pred_check
          %p491 = pneg %p237
        $region46: #{tpu_custom_call.1} parent=15 // pred_check_branch
          %493 = sbr.rel (%p491) target = $region48
        $region47: #{tpu_custom_call.1} parent=15 // pred_region
          %p494 = scmp.lt.s32.totalorder %s31, 1
          %s495 = scalar_select %p494, %s31, 1
          %s496 = scalar_lea.vmem %s7, %s495
        $region48: #{tpu_custom_call.1} parent=15 // pred_fallthru
          _
        // Predicated region
        $region49: #{tpu_custom_call.1} parent=15 // pred_check
          %p497 = pneg %p263
        $region50: #{tpu_custom_call.1} parent=15 // pred_check_branch
          %499 = sbr.rel (%p497) target = $region52
        $region51: #{tpu_custom_call.1} parent=15 // pred_region
          %p500 = scmp.lt.s32.totalorder %s31, 1
          %s501 = scalar_select %p500, %s31, 1
          %s502 = smul.addr %s501, 4
          %s503 = smul.addr %s502, 4
          %s504 = scalar_lea.vmem %s8, %s503
        $region52: #{tpu_custom_call.1} parent=15 // pred_fallthru
          _
        // Predicated region
        $region53: #{tpu_custom_call.1} parent=15 // pred_check
          %p505 = pneg %p289
        $region54: #{tpu_custom_call.1} parent=15 // pred_check_branch
          %507 = sbr.rel (%p505) target = $region56
        $region55: #{tpu_custom_call.1} parent=15 // pred_region
          %p508 = scmp.lt.s32.totalorder %s31, 1
          %s509 = scalar_select %p508, %s31, 1
          %s510 = scalar_lea.vmem %s9, %s509
        $region56: #{tpu_custom_call.1} parent=15 // pred_fallthru
          _
        // Predicated region
        $region57: #{tpu_custom_call.1} parent=15 // pred_check
          %p511 = pneg %p315
        $region58: #{tpu_custom_call.1} parent=15 // pred_check_branch
          %513 = sbr.rel (%p511) target = $region60
        $region59: #{tpu_custom_call.1} parent=15 // pred_region
          %p514 = scmp.lt.s32.totalorder %s31, 1
          %s515 = scalar_select %p514, %s31, 1
          %s516 = smul.addr %s515, 16
          %s517 = smul.addr %s516, 4
          %s518 = scalar_lea.vmem %s10, %s517
        $region60: #{tpu_custom_call.1} parent=15 // pred_fallthru
          _
        // Predicated region
        $region61: #{tpu_custom_call.1} parent=15 // pred_check
          %p519 = pneg %p341
        $region62: #{tpu_custom_call.1} parent=15 // pred_check_branch
          %521 = sbr.rel (%p519) target = $region64
        $region63: #{tpu_custom_call.1} parent=15 // pred_region
          %p522 = scmp.lt.s32.totalorder %s31, 1
          %s523 = scalar_select %p522, %s31, 1
          %s524 = scalar_lea.vmem %s11, %s523
        $region64: #{tpu_custom_call.1} parent=15 // pred_fallthru
          _
        // Predicated region
        $region65: #{tpu_custom_call.1} parent=15 // pred_check
          %p525 = pneg %p367
        $region66: #{tpu_custom_call.1} parent=15 // pred_check_branch
          %527 = sbr.rel (%p525) target = $region68
        $region67: #{tpu_custom_call.1} parent=15 // pred_region
          %p528 = scmp.lt.s32.totalorder %s31, 1
          %s529 = scalar_select %p528, %s31, 1
          %s530 = scalar_lea.vmem %s12, %s529
        $region68: #{tpu_custom_call.1} parent=15 // pred_fallthru
          _
        // Predicated region
        $region69: #{tpu_custom_call.1} parent=15 // pred_check
          %p531 = pneg %p393
        $region70: #{tpu_custom_call.1} parent=15 // pred_check_branch
          %533 = sbr.rel (%p531) target = $region72
        $region71: #{tpu_custom_call.1} parent=15 // pred_region
          %p534 = scmp.lt.s32.totalorder %s31, 1
          %s535 = scalar_select %p534, %s31, 1
          %s536 = scalar_lea.vmem %s13, %s535
        $region72: #{tpu_custom_call.1} parent=15 // pred_fallthru
          _
      $region16: #{tpu_custom_call.1} parent=5 // pred_fallthru
        _
      %p537 = scmp.le.s32.totalorder 1, %s23
      %p538 = scmp.lt.s32.totalorder %s23, 5
      %p539 = pnand %p537, %p538
      %p540 = pneg %p539
      // Predicated region
      $region73: #{tpu_custom_call.1} parent=5 // pred_check
        _
      $region74: #{tpu_custom_call.1} parent=5 // pred_check_branch
        %542 = sbr.rel (%p539) target = $region76
      $region75: #{tpu_custom_call.1} parent=5 // pred_region
        %s543 = ssub.s32 %s23, 1
        %p544 = scmp.lt.s32.totalorder %s32, 1
        %s545 = scalar_select %p544, %s32, 1
        %s546 = smul.addr %s545, 8
        %s547 = scalar_lea.vmem %s0, %s546
        %p548 = pneg %p61
        %p549 = pneg %p58
        %p550 = scmp.lt.s32.totalorder %s32, 1
        %s551 = scalar_select %p550, %s32, 1
        %s552 = scalar_lea.vmem %s1, %s551
        %p553 = pneg %p87
        %p554 = pneg %p84
        %p555 = scmp.lt.s32.totalorder %s33, 1
        %s556 = scalar_select %p555, %s33, 1
        %s557 = smul.addr %s556, 4
        %s558 = smul.addr %s557, 4
        %s559 = scalar_lea.vmem %s2, %s558
        %p560 = pneg %p113
        %p561 = pneg %p110
        %p562 = scmp.lt.s32.totalorder %s33, 1
        %s563 = scalar_select %p562, %s33, 1
        %s564 = scalar_lea.vmem %s3, %s563
        %p565 = pneg %p139
        %p566 = pneg %p136
        %p567 = scmp.lt.s32.totalorder %s33, 1
        %s568 = scalar_select %p567, %s33, 1
        %s569 = smul.addr %s568, 4
        %s570 = smul.addr %s569, 4
        %s571 = scalar_lea.vmem %s4, %s570
        %p572 = pneg %p165
        %p573 = pneg %p162
        %p574 = scmp.lt.s32.totalorder %s33, 1
        %s575 = scalar_select %p574, %s33, 1
        %s576 = scalar_lea.vmem %s5, %s575
        %p577 = pneg %p191
        %p578 = pneg %p188
        %p579 = scmp.lt.s32.totalorder %s33, 1
        %s580 = scalar_select %p579, %s33, 1
        %s581 = scalar_lea.vmem %s6, %s580
        %p582 = pneg %p217
        %p583 = pneg %p214
        %p584 = scmp.lt.s32.totalorder %s33, 1
        %s585 = scalar_select %p584, %s33, 1
        %s586 = scalar_lea.vmem %s7, %s585
        %p587 = pneg %p243
        %p588 = pneg %p240
        %p589 = scmp.lt.s32.totalorder %s33, 1
        %s590 = scalar_select %p589, %s33, 1
        %s591 = smul.addr %s590, 4
        %s592 = smul.addr %s591, 4
        %s593 = scalar_lea.vmem %s8, %s592
        %p594 = pneg %p269
        %p595 = pneg %p266
        %p596 = scmp.lt.s32.totalorder %s33, 1
        %s597 = scalar_select %p596, %s33, 1
        %s598 = scalar_lea.vmem %s9, %s597
        %p599 = pneg %p295
        %p600 = pneg %p292
        %p601 = scmp.lt.s32.totalorder %s33, 1
        %s602 = scalar_select %p601, %s33, 1
        %s603 = smul.addr %s602, 16
        %s604 = smul.addr %s603, 4
        %s605 = scalar_lea.vmem %s10, %s604
        %p606 = pneg %p321
        %p607 = pneg %p318
        %p608 = scmp.lt.s32.totalorder %s33, 1
        %s609 = scalar_select %p608, %s33, 1
        %s610 = scalar_lea.vmem %s11, %s609
        %p611 = pneg %p347
        %p612 = pneg %p344
        %p613 = scmp.lt.s32.totalorder %s33, 1
        %s614 = scalar_select %p613, %s33, 1
        %s615 = scalar_lea.vmem %s12, %s614
        %p616 = pneg %p373
        %p617 = pneg %p370
        %p618 = scmp.lt.s32.totalorder %s33, 1
        %s619 = scalar_select %p618, %s33, 1
        %s620 = scalar_lea.vmem %s13, %s619
        %p621 = pneg %p399
        %p622 = pneg %p396
        %p623 = pneg %p425
        %p624 = pneg %p422
        %s625 = sand.u32 %s412, 1
        %s626 = scalar_lea.sflag [#allocation4], %s625
        %s627 = sand.u32 %s412, 1
        %s628 = smul.addr %s627, 8
        %s629 = scalar_lea.vmem [#allocation3], %s628
        %p630 = scmp.lt.s32.totalorder %s32, 1
        %s631 = scalar_select %p630, %s32, 1
        %s632 = smul.addr %s631, 8
        %s633 = scalar_lea.vmem %s0, %s632
        %p634 = scmp.lt.s32.totalorder %s32, 1
        %s635 = scalar_select %p634, %s32, 1
        %s636 = scalar_lea.vmem %s1, %s635
        %p637 = scmp.lt.s32.totalorder %s33, 1
        %s638 = scalar_select %p637, %s33, 1
        %s639 = smul.addr %s638, 4
        %s640 = smul.addr %s639, 4
        %s641 = scalar_lea.vmem %s2, %s640
        %p642 = scmp.lt.s32.totalorder %s33, 1
        %s643 = scalar_select %p642, %s33, 1
        %s644 = scalar_lea.vmem %s3, %s643
        %p645 = scmp.lt.s32.totalorder %s33, 1
        %s646 = scalar_select %p645, %s33, 1
        %s647 = smul.addr %s646, 4
        %s648 = smul.addr %s647, 4
        %s649 = scalar_lea.vmem %s4, %s648
        %p650 = scmp.lt.s32.totalorder %s33, 1
        %s651 = scalar_select %p650, %s33, 1
        %s652 = scalar_lea.vmem %s5, %s651
        %p653 = scmp.lt.s32.totalorder %s33, 1
        %s654 = scalar_select %p653, %s33, 1
        %s655 = scalar_lea.vmem %s6, %s654
        %p656 = scmp.lt.s32.totalorder %s33, 1
        %s657 = scalar_select %p656, %s33, 1
        %s658 = scalar_lea.vmem %s7, %s657
        %p659 = scmp.lt.s32.totalorder %s33, 1
        %s660 = scalar_select %p659, %s33, 1
        %s661 = smul.addr %s660, 4
        %s662 = smul.addr %s661, 4
        %s663 = scalar_lea.vmem %s8, %s662
        %p664 = scmp.lt.s32.totalorder %s33, 1
        %s665 = scalar_select %p664, %s33, 1
        %s666 = scalar_lea.vmem %s9, %s665
        %p667 = scmp.lt.s32.totalorder %s33, 1
        %s668 = scalar_select %p667, %s33, 1
        %s669 = smul.addr %s668, 16
        %s670 = smul.addr %s669, 4
        %s671 = scalar_lea.vmem %s10, %s670
        %p672 = scmp.lt.s32.totalorder %s33, 1
        %s673 = scalar_select %p672, %s33, 1
        %s674 = scalar_lea.vmem %s11, %s673
        %p675 = scmp.lt.s32.totalorder %s33, 1
        %s676 = scalar_select %p675, %s33, 1
        %s677 = scalar_lea.vmem %s12, %s676
        %p678 = scmp.lt.s32.totalorder %s33, 1
        %s679 = scalar_select %p678, %s33, 1
        %s680 = scalar_lea.vmem %s13, %s679
        %p682 = scmp.eq.s32.totalorder %s33, 0
        // Predicated region
        $region77: #{tpu_custom_call.1} parent=75 // pred_check
          %p683 = pneg %p682
        $region78: #{tpu_custom_call.1} parent=75 // pred_check_branch
          %685 = sbr.rel (%p683) target = $region80
        $region79: #{tpu_custom_call.1} parent=75 // pred_region
          %v686 = vld [vmem:[%s633] sm:$0xff]
          %vm687 = vcmask 261120
          %688 = vst.msk [vmem:[#allocation2] sm:$0xff] %vm687, %v686
        $region80: #{tpu_custom_call.1} parent=75 // pred_fallthru
          _
        %v689 = vld [vmem:[#allocation2] sm:$0xff]
        %v690 = vld [vmem:[%s636] sm:$0x1]
        %v691 = vpack.c.bf16 %v689, %v689
        %v692 = vld [vmem:[%s641] sm:$0xf]
        %v693 = vld [vmem:[%s641 + $0x4] sm:$0xf]
        %v694 = vld [vmem:[%s641 + $0x8] sm:$0xf]
        %v695 = vld [vmem:[%s641 + $0xc] sm:$0xf]
        %v696 = vld [vmem:[%s644] sm:$0x1]
        %v698 = vlaneseq
        %v699 = vshrl.u32 %v698, 7
        %v700 = vsub.s32 0, %v699
        %v701 = vrot.slane %v696, %v700
        %v707 = vunpack.c.l.b16 %v692
        %v708 = vunpack.c.l.b16 %v693
        %v709 = vunpack.c.l.b16 %v694
        %v710 = vunpack.c.l.b16 %v695
        %v711 = vpack.c.b16 %v708, %v707
        %v712 = vpack.c.b16 %v710, %v709
        %vm715 = vcmask 261120
        %v717 = vsel %vm715, %v691, 0
        %719 = vmatprep.subr.bf16.mxu0 0
        %720 = vmatpush1.bf16.msra.mxu0 %v711
        %721 = vmatprep.subr.bf16.mxu0 0
        %722 = vmatpush1.bf16.msra.mxu0 %v712
        %723 = vmatprep.subr.bf16.mxu0 0
        %724 = vmatpush1.bf16.msra.mxu0 0
        %725 = vmatprep.subr.bf16.mxu0 0
        %726 = vmatpush1.bf16.msra.mxu0 0
        %727 = vmatprep.subr.bf16.mxu0 0
        %728 = vmatpush1.bf16.msra.mxu0 0
        %729 = vmatprep.subr.bf16.mxu0 0
        %730 = vmatpush1.bf16.msra.mxu0 0
        %731 = vmatprep.subr.bf16.mxu0 0
        %732 = vmatpush1.bf16.msra.mxu0 0
        %733 = vmatprep.subr.bf16.mxu0 0
        %734 = vmatpush1.bf16.msra.mxu0 0
        %735 = vmatprep.subr.bf16.mxu0 0
        %736 = vmatpush1.bf16.msra.mxu0 0
        %737 = vmatprep.subr.bf16.mxu0 0
        %738 = vmatpush1.bf16.msra.mxu0 0
        %739 = vmatprep.subr.bf16.mxu0 0
        %740 = vmatpush1.bf16.msra.mxu0 0
        %741 = vmatprep.subr.bf16.mxu0 0
        %742 = vmatpush1.bf16.msra.mxu0 0
        %743 = vmatprep.subr.bf16.mxu0 0
        %744 = vmatpush1.bf16.msra.mxu0 0
        %745 = vmatprep.subr.bf16.mxu0 0
        %746 = vmatpush1.bf16.msra.mxu0 0
        %747 = vmatprep.subr.bf16.mxu0 0
        %748 = vmatpush1.bf16.msra.mxu0 0
        %749 = vmatprep.subr.bf16.mxu0 0
        %750 = vmatpush1.bf16.msra.mxu0 0
        %751 = vmatprep.mubr.bf16.mxu0 0
        %752 = vmatmul.mubr.bf16.gmra.mrb[0].mxu0 %v717
        %v753 = vpop.f32.mrb[0].mxu0
        %v754 = vadd.f32 %v701, %v753
        %v755 = vpop.f32.mrb[0].mxu0
        %v756 = vpop.f32.mrb[0].mxu0
        %v757 = vpop.f32.mrb[0].mxu0
        %758 = vdwg.mxu0
        %760 = vrot.lane.b32.xlu0 %v754, 120
        %v761 = vpop.permute.xlu0 %760
        %763 = vrot.lane.b32.xlu0 %v754, 112
        %v764 = vpop.permute.xlu0 %763
        %766 = vrot.lane.b32.xlu0 %v754, 104
        %v767 = vpop.permute.xlu0 %766
        %v769 = vpack.c.bf16 %v754, %v754
        %v770 = vpack.c.bf16 %v761, %v761
        %v771 = vpack.c.bf16 %v764, %v764
        %v772 = vpack.c.bf16 %v767, %v767
        %v774 = vlaneseq
        %v775 = vshrl.u32 %v774, 7
        %v776 = vsub.s32 0, %v775
        %v777 = vrot.slane %v690, %v776
        %780 = vrot.lane.b32.xlu0 %v769, 96
        %v781 = vpop.permute.xlu0 %780
        %vm782 = vcmask 64512
        %v784 = vsel %vm782, %v769, 0
        %v787 = vsel %vm782, %v781, 0
        %789 = vmatprep.subr.bf16.mxu0 0
        %790 = vmatpush1.bf16.xpose.msra.mxu0 %v787
        %791 = vmatprep.subr.bf16.mxu0 0
        %792 = vmatpush1.bf16.xpose.msra.mxu0 0
        %793 = vmatprep.subr.bf16.mxu0 0
        %794 = vmatpush1.bf16.xpose.msra.mxu0 0
        %795 = vmatprep.subr.bf16.mxu0 0
        %796 = vmatpush1.bf16.xpose.msra.mxu0 0
        %797 = vmatprep.subr.bf16.mxu0 0
        %798 = vmatpush1.bf16.xpose.msra.mxu0 0
        %799 = vmatprep.subr.bf16.mxu0 0
        %800 = vmatpush1.bf16.xpose.msra.mxu0 0
        %801 = vmatprep.subr.bf16.mxu0 0
        %802 = vmatpush1.bf16.xpose.msra.mxu0 0
        %803 = vmatprep.subr.bf16.mxu0 0
        %804 = vmatpush1.bf16.xpose.msra.mxu0 0
        %805 = vmatprep.subr.bf16.mxu0 0
        %806 = vmatpush1.bf16.xpose.msra.mxu0 0
        %807 = vmatprep.subr.bf16.mxu0 0
        %808 = vmatpush1.bf16.xpose.msra.mxu0 0
        %809 = vmatprep.subr.bf16.mxu0 0
        %810 = vmatpush1.bf16.xpose.msra.mxu0 0
        %811 = vmatprep.subr.bf16.mxu0 0
        %812 = vmatpush1.bf16.xpose.msra.mxu0 0
        %813 = vmatprep.subr.bf16.mxu0 0
        %814 = vmatpush1.bf16.xpose.msra.mxu0 0
        %815 = vmatprep.subr.bf16.mxu0 0
        %816 = vmatpush1.bf16.xpose.msra.mxu0 0
        %817 = vmatprep.subr.bf16.mxu0 0
        %818 = vmatpush1.bf16.xpose.msra.mxu0 0
        %819 = vmatprep.subr.bf16.mxu0 0
        %820 = vmatpush1.bf16.xpose.msra.mxu0 0
        %821 = vmatprep.mubr.bf16.mxu0 0
        %822 = vmatmul.mubr.bf16.gmra.mrb[0].mxu0 %v784
        %v823 = vpop.f32.mrb[0].mxu0
        %v824 = vadd.f32 %v777, %v823
        %v825 = vpop.f32.mrb[0].mxu0
        %v826 = vpop.f32.mrb[0].mxu0
        %v827 = vpop.f32.mrb[0].mxu0
        %828 = vdwg.mxu0
        %830 = vrot.lane.b32.xlu0 %v770, 96
        %v831 = vpop.permute.xlu0 %830
        %v833 = vsel %vm782, %v770, 0
        %v836 = vsel %vm782, %v831, 0
        %838 = vmatprep.subr.bf16.mxu0 0
        %839 = vmatpush1.bf16.xpose.msra.mxu0 %v836
        %840 = vmatprep.subr.bf16.mxu0 0
        %841 = vmatpush1.bf16.xpose.msra.mxu0 0
        %842 = vmatprep.subr.bf16.mxu0 0
        %843 = vmatpush1.bf16.xpose.msra.mxu0 0
        %844 = vmatprep.subr.bf16.mxu0 0
        %845 = vmatpush1.bf16.xpose.msra.mxu0 0
        %846 = vmatprep.subr.bf16.mxu0 0
        %847 = vmatpush1.bf16.xpose.msra.mxu0 0
        %848 = vmatprep.subr.bf16.mxu0 0
        %849 = vmatpush1.bf16.xpose.msra.mxu0 0
        %850 = vmatprep.subr.bf16.mxu0 0
        %851 = vmatpush1.bf16.xpose.msra.mxu0 0
        %852 = vmatprep.subr.bf16.mxu0 0
        %853 = vmatpush1.bf16.xpose.msra.mxu0 0
        %854 = vmatprep.subr.bf16.mxu0 0
        %855 = vmatpush1.bf16.xpose.msra.mxu0 0
        %856 = vmatprep.subr.bf16.mxu0 0
        %857 = vmatpush1.bf16.xpose.msra.mxu0 0
        %858 = vmatprep.subr.bf16.mxu0 0
        %859 = vmatpush1.bf16.xpose.msra.mxu0 0
        %860 = vmatprep.subr.bf16.mxu0 0
        %861 = vmatpush1.bf16.xpose.msra.mxu0 0
        %862 = vmatprep.subr.bf16.mxu0 0
        %863 = vmatpush1.bf16.xpose.msra.mxu0 0
        %864 = vmatprep.subr.bf16.mxu0 0
        %865 = vmatpush1.bf16.xpose.msra.mxu0 0
        %866 = vmatprep.subr.bf16.mxu0 0
        %867 = vmatpush1.bf16.xpose.msra.mxu0 0
        %868 = vmatprep.subr.bf16.mxu0 0
        %869 = vmatpush1.bf16.xpose.msra.mxu0 0
        %870 = vmatprep.mubr.bf16.mxu0 0
        %871 = vmatmul.mubr.bf16.gmra.mrb[0].mxu0 %v833
        %v872 = vpop.f32.mrb[0].mxu0
        %v873 = vadd.f32 %v777, %v872
        %v874 = vpop.f32.mrb[0].mxu0
        %v875 = vpop.f32.mrb[0].mxu0
        %v876 = vpop.f32.mrb[0].mxu0
        %877 = vdwg.mxu0
        %879 = vrot.lane.b32.xlu0 %v771, 96
        %v880 = vpop.permute.xlu0 %879
        %v882 = vsel %vm782, %v771, 0
        %v885 = vsel %vm782, %v880, 0
        %887 = vmatprep.subr.bf16.mxu0 0
        %888 = vmatpush1.bf16.xpose.msra.mxu0 %v885
        %889 = vmatprep.subr.bf16.mxu0 0
        %890 = vmatpush1.bf16.xpose.msra.mxu0 0
        %891 = vmatprep.subr.bf16.mxu0 0
        %892 = vmatpush1.bf16.xpose.msra.mxu0 0
        %893 = vmatprep.subr.bf16.mxu0 0
        %894 = vmatpush1.bf16.xpose.msra.mxu0 0
        %895 = vmatprep.subr.bf16.mxu0 0
        %896 = vmatpush1.bf16.xpose.msra.mxu0 0
        %897 = vmatprep.subr.bf16.mxu0 0
        %898 = vmatpush1.bf16.xpose.msra.mxu0 0
        %899 = vmatprep.subr.bf16.mxu0 0
        %900 = vmatpush1.bf16.xpose.msra.mxu0 0
        %901 = vmatprep.subr.bf16.mxu0 0
        %902 = vmatpush1.bf16.xpose.msra.mxu0 0
        %903 = vmatprep.subr.bf16.mxu0 0
        %904 = vmatpush1.bf16.xpose.msra.mxu0 0
        %905 = vmatprep.subr.bf16.mxu0 0
        %906 = vmatpush1.bf16.xpose.msra.mxu0 0
        %907 = vmatprep.subr.bf16.mxu0 0
        %908 = vmatpush1.bf16.xpose.msra.mxu0 0
        %909 = vmatprep.subr.bf16.mxu0 0
        %910 = vmatpush1.bf16.xpose.msra.mxu0 0
        %911 = vmatprep.subr.bf16.mxu0 0
        %912 = vmatpush1.bf16.xpose.msra.mxu0 0
        %913 = vmatprep.subr.bf16.mxu0 0
        %914 = vmatpush1.bf16.xpose.msra.mxu0 0
        %915 = vmatprep.subr.bf16.mxu0 0
        %916 = vmatpush1.bf16.xpose.msra.mxu0 0
        %917 = vmatprep.subr.bf16.mxu0 0
        %918 = vmatpush1.bf16.xpose.msra.mxu0 0
        %919 = vmatprep.mubr.bf16.mxu0 0
        %920 = vmatmul.mubr.bf16.gmra.mrb[0].mxu0 %v882
        %v921 = vpop.f32.mrb[0].mxu0
        %v922 = vadd.f32 %v777, %v921
        %v923 = vpop.f32.mrb[0].mxu0
        %v924 = vpop.f32.mrb[0].mxu0
        %v925 = vpop.f32.mrb[0].mxu0
        %926 = vdwg.mxu0
        %928 = vrot.lane.b32.xlu0 %v772, 96
        %v929 = vpop.permute.xlu0 %928
        %v931 = vsel %vm782, %v772, 0
        %v934 = vsel %vm782, %v929, 0
        %936 = vmatprep.subr.bf16.mxu0 0
        %937 = vmatpush1.bf16.xpose.msra.mxu0 %v934
        %938 = vmatprep.subr.bf16.mxu0 0
        %939 = vmatpush1.bf16.xpose.msra.mxu0 0
        %940 = vmatprep.subr.bf16.mxu0 0
        %941 = vmatpush1.bf16.xpose.msra.mxu0 0
        %942 = vmatprep.subr.bf16.mxu0 0
        %943 = vmatpush1.bf16.xpose.msra.mxu0 0
        %944 = vmatprep.subr.bf16.mxu0 0
        %945 = vmatpush1.bf16.xpose.msra.mxu0 0
        %946 = vmatprep.subr.bf16.mxu0 0
        %947 = vmatpush1.bf16.xpose.msra.mxu0 0
        %948 = vmatprep.subr.bf16.mxu0 0
        %949 = vmatpush1.bf16.xpose.msra.mxu0 0
        %950 = vmatprep.subr.bf16.mxu0 0
        %951 = vmatpush1.bf16.xpose.msra.mxu0 0
        %952 = vmatprep.subr.bf16.mxu0 0
        %953 = vmatpush1.bf16.xpose.msra.mxu0 0
        %954 = vmatprep.subr.bf16.mxu0 0
        %955 = vmatpush1.bf16.xpose.msra.mxu0 0
        %956 = vmatprep.subr.bf16.mxu0 0
        %957 = vmatpush1.bf16.xpose.msra.mxu0 0
        %958 = vmatprep.subr.bf16.mxu0 0
        %959 = vmatpush1.bf16.xpose.msra.mxu0 0
        %960 = vmatprep.subr.bf16.mxu0 0
        %961 = vmatpush1.bf16.xpose.msra.mxu0 0
        %962 = vmatprep.subr.bf16.mxu0 0
        %963 = vmatpush1.bf16.xpose.msra.mxu0 0
        %964 = vmatprep.subr.bf16.mxu0 0
        %965 = vmatpush1.bf16.xpose.msra.mxu0 0
        %966 = vmatprep.subr.bf16.mxu0 0
        %967 = vmatpush1.bf16.xpose.msra.mxu0 0
        %968 = vmatprep.mubr.bf16.mxu0 0
        %969 = vmatmul.mubr.bf16.gmra.mrb[0].mxu0 %v931
        %v970 = vpop.f32.mrb[0].mxu0
        %v971 = vadd.f32 %v777, %v970
        %v972 = vpop.f32.mrb[0].mxu0
        %v973 = vpop.f32.mrb[0].mxu0
        %v974 = vpop.f32.mrb[0].mxu0
        %975 = vdwg.mxu0
        %v976 = vsel %vm782, %v824, -inf
        %977 = vmax.xlane.f32.xlu0 %v976
        %v978 = vpop.xlane.xlu0 %977
        %v979 = vsel %vm782, %v873, -inf
        %980 = vmax.xlane.f32.xlu0 %v979
        %v981 = vpop.xlane.xlu0 %980
        %v982 = vsel %vm782, %v922, -inf
        %983 = vmax.xlane.f32.xlu0 %v982
        %v984 = vpop.xlane.xlu0 %983
        %v985 = vsel %vm782, %v971, -inf
        %986 = vmax.xlane.f32.xlu0 %v985
        %v987 = vpop.xlane.xlu0 %986
        %v988 = vsub.f32 %v824, %v978
        %v989 = vsub.f32 %v873, %v981
        %v990 = vsub.f32 %v922, %v984
        %v991 = vsub.f32 %v971, %v987
        %v992 = vmul.f32 %v988, 1.442695
        %v993 = vpow.pop %v992
        %v994 = vmul.f32 %v989, 1.442695
        %v995 = vpow.pop %v994
        %v996 = vmul.f32 %v990, 1.442695
        %v997 = vpow.pop %v996
        %v998 = vmul.f32 %v991, 1.442695
        %v999 = vpow.pop %v998
        %v1000 = vsel %vm782, %v993, 0.0
        %1001 = vadd.xlane.f32.xlu0 %v1000
        %v1002 = vpop.xlane.xlu0 %1001
        %v1003 = vsel %vm782, %v995, 0.0
        %1004 = vadd.xlane.f32.xlu0 %v1003
        %v1005 = vpop.xlane.xlu0 %1004
        %v1006 = vsel %vm782, %v997, 0.0
        %1007 = vadd.xlane.f32.xlu0 %v1006
        %v1008 = vpop.xlane.xlu0 %1007
        %v1009 = vsel %vm782, %v999, 0.0
        %1010 = vadd.xlane.f32.xlu0 %v1009
        %v1011 = vpop.xlane.xlu0 %1010
        %v1012 = vrcp.pop %v1002
        %v1013 = vrcp.pop %v1005
        %v1014 = vrcp.pop %v1008
        %v1015 = vrcp.pop %v1011
        %v1016 = vmul.f32 %v993, %v1012
        %v1017 = vmul.f32 %v995, %v1013
        %v1018 = vmul.f32 %v997, %v1014
        %v1019 = vmul.f32 %v999, %v1015
        %v1020 = vpack.c.bf16 %v1016, %v1016
        %v1021 = vpack.c.bf16 %v1017, %v1017
        %v1022 = vpack.c.bf16 %v1018, %v1018
        %v1023 = vpack.c.bf16 %v1019, %v1019
        %1024 = vrot.lane.b32.xlu0 %v769, 64
        %v1025 = vpop.permute.xlu0 %1024
        %v1027 = vsel %vm782, %v1020, 0
        %vm1029 = vcmask 1043456
        %v1031 = vsel %vm1029, %v1025, 0
        %1033 = vmatprep.subr.bf16.mxu0 0
        %1034 = vmatpush1.bf16.msra.mxu0 %v1031
        %1035 = vmatprep.subr.bf16.mxu0 0
        %1036 = vmatpush1.bf16.msra.mxu0 0
        %1037 = vmatprep.subr.bf16.mxu0 0
        %1038 = vmatpush1.bf16.msra.mxu0 0
        %1039 = vmatprep.subr.bf16.mxu0 0
        %1040 = vmatpush1.bf16.msra.mxu0 0
        %1041 = vmatprep.subr.bf16.mxu0 0
        %1042 = vmatpush1.bf16.msra.mxu0 0
        %1043 = vmatprep.subr.bf16.mxu0 0
        %1044 = vmatpush1.bf16.msra.mxu0 0
        %1045 = vmatprep.subr.bf16.mxu0 0
        %1046 = vmatpush1.bf16.msra.mxu0 0
        %1047 = vmatprep.subr.bf16.mxu0 0
        %1048 = vmatpush1.bf16.msra.mxu0 0
        %1049 = vmatprep.subr.bf16.mxu0 0
        %1050 = vmatpush1.bf16.msra.mxu0 0
        %1051 = vmatprep.subr.bf16.mxu0 0
        %1052 = vmatpush1.bf16.msra.mxu0 0
        %1053 = vmatprep.subr.bf16.mxu0 0
        %1054 = vmatpush1.bf16.msra.mxu0 0
        %1055 = vmatprep.subr.bf16.mxu0 0
        %1056 = vmatpush1.bf16.msra.mxu0 0
        %1057 = vmatprep.subr.bf16.mxu0 0
        %1058 = vmatpush1.bf16.msra.mxu0 0
        %1059 = vmatprep.subr.bf16.mxu0 0
        %1060 = vmatpush1.bf16.msra.mxu0 0
        %1061 = vmatprep.subr.bf16.mxu0 0
        %1062 = vmatpush1.bf16.msra.mxu0 0
        %1063 = vmatprep.subr.bf16.mxu0 0
        %1064 = vmatpush1.bf16.msra.mxu0 0
        %1065 = vmatprep.mubr.bf16.mxu0 0
        %1066 = vmatmul.mubr.bf16.gmra.mrb[0].mxu0 %v1027
        %v1067 = vpop.f32.mrb[0].mxu0
        %v1068 = vadd.f32 0.0, %v1067
        %v1069 = vpop.f32.mrb[0].mxu0
        %v1070 = vpop.f32.mrb[0].mxu0
        %v1071 = vpop.f32.mrb[0].mxu0
        %1072 = vdwg.mxu0
        %1073 = vrot.lane.b32.xlu0 %v770, 64
        %v1074 = vpop.permute.xlu0 %1073
        %v1076 = vsel %vm782, %v1021, 0
        %v1079 = vsel %vm1029, %v1074, 0
        %1081 = vmatprep.subr.bf16.mxu0 0
        %1082 = vmatpush1.bf16.msra.mxu0 %v1079
        %1083 = vmatprep.subr.bf16.mxu0 0
        %1084 = vmatpush1.bf16.msra.mxu0 0
        %1085 = vmatprep.subr.bf16.mxu0 0
        %1086 = vmatpush1.bf16.msra.mxu0 0
        %1087 = vmatprep.subr.bf16.mxu0 0
        %1088 = vmatpush1.bf16.msra.mxu0 0
        %1089 = vmatprep.subr.bf16.mxu0 0
        %1090 = vmatpush1.bf16.msra.mxu0 0
        %1091 = vmatprep.subr.bf16.mxu0 0
        %1092 = vmatpush1.bf16.msra.mxu0 0
        %1093 = vmatprep.subr.bf16.mxu0 0
        %1094 = vmatpush1.bf16.msra.mxu0 0
        %1095 = vmatprep.subr.bf16.mxu0 0
        %1096 = vmatpush1.bf16.msra.mxu0 0
        %1097 = vmatprep.subr.bf16.mxu0 0
        %1098 = vmatpush1.bf16.msra.mxu0 0
        %1099 = vmatprep.subr.bf16.mxu0 0
        %1100 = vmatpush1.bf16.msra.mxu0 0
        %1101 = vmatprep.subr.bf16.mxu0 0
        %1102 = vmatpush1.bf16.msra.mxu0 0
        %1103 = vmatprep.subr.bf16.mxu0 0
        %1104 = vmatpush1.bf16.msra.mxu0 0
        %1105 = vmatprep.subr.bf16.mxu0 0
        %1106 = vmatpush1.bf16.msra.mxu0 0
        %1107 = vmatprep.subr.bf16.mxu0 0
        %1108 = vmatpush1.bf16.msra.mxu0 0
        %1109 = vmatprep.subr.bf16.mxu0 0
        %1110 = vmatpush1.bf16.msra.mxu0 0
        %1111 = vmatprep.subr.bf16.mxu0 0
        %1112 = vmatpush1.bf16.msra.mxu0 0
        %1113 = vmatprep.mubr.bf16.mxu0 0
        %1114 = vmatmul.mubr.bf16.gmra.mrb[0].mxu0 %v1076
        %v1115 = vpop.f32.mrb[0].mxu0
        %v1116 = vadd.f32 0.0, %v1115
        %v1117 = vpop.f32.mrb[0].mxu0
        %v1118 = vpop.f32.mrb[0].mxu0
        %v1119 = vpop.f32.mrb[0].mxu0
        %1120 = vdwg.mxu0
        %1121 = vrot.lane.b32.xlu0 %v771, 64
        %v1122 = vpop.permute.xlu0 %1121
        %v1124 = vsel %vm782, %v1022, 0
        %v1127 = vsel %vm1029, %v1122, 0
        %1129 = vmatprep.subr.bf16.mxu0 0
        %1130 = vmatpush1.bf16.msra.mxu0 %v1127
        %1131 = vmatprep.subr.bf16.mxu0 0
        %1132 = vmatpush1.bf16.msra.mxu0 0
        %1133 = vmatprep.subr.bf16.mxu0 0
        %1134 = vmatpush1.bf16.msra.mxu0 0
        %1135 = vmatprep.subr.bf16.mxu0 0
        %1136 = vmatpush1.bf16.msra.mxu0 0
        %1137 = vmatprep.subr.bf16.mxu0 0
        %1138 = vmatpush1.bf16.msra.mxu0 0
        %1139 = vmatprep.subr.bf16.mxu0 0
        %1140 = vmatpush1.bf16.msra.mxu0 0
        %1141 = vmatprep.subr.bf16.mxu0 0
        %1142 = vmatpush1.bf16.msra.mxu0 0
        %1143 = vmatprep.subr.bf16.mxu0 0
        %1144 = vmatpush1.bf16.msra.mxu0 0
        %1145 = vmatprep.subr.bf16.mxu0 0
        %1146 = vmatpush1.bf16.msra.mxu0 0
        %1147 = vmatprep.subr.bf16.mxu0 0
        %1148 = vmatpush1.bf16.msra.mxu0 0
        %1149 = vmatprep.subr.bf16.mxu0 0
        %1150 = vmatpush1.bf16.msra.mxu0 0
        %1151 = vmatprep.subr.bf16.mxu0 0
        %1152 = vmatpush1.bf16.msra.mxu0 0
        %1153 = vmatprep.subr.bf16.mxu0 0
        %1154 = vmatpush1.bf16.msra.mxu0 0
        %1155 = vmatprep.subr.bf16.mxu0 0
        %1156 = vmatpush1.bf16.msra.mxu0 0
        %1157 = vmatprep.subr.bf16.mxu0 0
        %1158 = vmatpush1.bf16.msra.mxu0 0
        %1159 = vmatprep.subr.bf16.mxu0 0
        %1160 = vmatpush1.bf16.msra.mxu0 0
        %1161 = vmatprep.mubr.bf16.mxu0 0
        %1162 = vmatmul.mubr.bf16.gmra.mrb[0].mxu0 %v1124
        %v1163 = vpop.f32.mrb[0].mxu0
        %v1164 = vadd.f32 0.0, %v1163
        %v1165 = vpop.f32.mrb[0].mxu0
        %v1166 = vpop.f32.mrb[0].mxu0
        %v1167 = vpop.f32.mrb[0].mxu0
        %1168 = vdwg.mxu0
        %1169 = vrot.lane.b32.xlu0 %v772, 64
        %v1170 = vpop.permute.xlu0 %1169
        %v1172 = vsel %vm782, %v1023, 0
        %v1175 = vsel %vm1029, %v1170, 0
        %1177 = vmatprep.subr.bf16.mxu0 0
        %1178 = vmatpush1.bf16.msra.mxu0 %v1175
        %1179 = vmatprep.subr.bf16.mxu0 0
        %1180 = vmatpush1.bf16.msra.mxu0 0
        %1181 = vmatprep.subr.bf16.mxu0 0
        %1182 = vmatpush1.bf16.msra.mxu0 0
        %1183 = vmatprep.subr.bf16.mxu0 0
        %1184 = vmatpush1.bf16.msra.mxu0 0
        %1185 = vmatprep.subr.bf16.mxu0 0
        %1186 = vmatpush1.bf16.msra.mxu0 0
        %1187 = vmatprep.subr.bf16.mxu0 0
        %1188 = vmatpush1.bf16.msra.mxu0 0
        %1189 = vmatprep.subr.bf16.mxu0 0
        %1190 = vmatpush1.bf16.msra.mxu0 0
        %1191 = vmatprep.subr.bf16.mxu0 0
        %1192 = vmatpush1.bf16.msra.mxu0 0
        %1193 = vmatprep.subr.bf16.mxu0 0
        %1194 = vmatpush1.bf16.msra.mxu0 0
        %1195 = vmatprep.subr.bf16.mxu0 0
        %1196 = vmatpush1.bf16.msra.mxu0 0
        %1197 = vmatprep.subr.bf16.mxu0 0
        %1198 = vmatpush1.bf16.msra.mxu0 0
        %1199 = vmatprep.subr.bf16.mxu0 0
        %1200 = vmatpush1.bf16.msra.mxu0 0
        %1201 = vmatprep.subr.bf16.mxu0 0
        %1202 = vmatpush1.bf16.msra.mxu0 0
        %1203 = vmatprep.subr.bf16.mxu0 0
        %1204 = vmatpush1.bf16.msra.mxu0 0
        %1205 = vmatprep.subr.bf16.mxu0 0
        %1206 = vmatpush1.bf16.msra.mxu0 0
        %1207 = vmatprep.subr.bf16.mxu0 0
        %1208 = vmatpush1.bf16.msra.mxu0 0
        %1209 = vmatprep.mubr.bf16.mxu0 0
        %1210 = vmatmul.mubr.bf16.gmra.mrb[0].mxu0 %v1172
        %v1211 = vpop.f32.mrb[0].mxu0
        %v1212 = vadd.f32 0.0, %v1211
        %v1213 = vpop.f32.mrb[0].mxu0
        %v1214 = vpop.f32.mrb[0].mxu0
        %v1215 = vpop.f32.mrb[0].mxu0
        %1216 = vdwg.mxu0
        %1218 = vrot.lane.b32.xlu0 %v1116, 8
        %v1219 = vpop.permute.xlu0 %1218
        %1222 = vrot.lane.b32.xlu0 %v1164, 16
        %v1223 = vpop.permute.xlu0 %1222
        %1226 = vrot.lane.b32.xlu0 %v1212, 24
        %v1227 = vpop.permute.xlu0 %1226
        %v1229 = vsel %vm782, %v1068, %v1219
        %vm1230 = vcmask 130048
        %v1231 = vsel %vm1230, %v1229, %v1223
        %vm1232 = vcmask 195584
        %v1233 = vsel %vm1232, %v1231, %v1227
        %v1234 = vpack.c.bf16 %v1233, %v1233
        %v1235 = vld [vmem:[%s649] sm:$0xf]
        %v1236 = vld [vmem:[%s649 + $0x4] sm:$0xf]
        %v1237 = vld [vmem:[%s649 + $0x8] sm:$0xf]
        %v1238 = vld [vmem:[%s649 + $0xc] sm:$0xf]
        %v1239 = vld [vmem:[%s652] sm:$0x1]
        %v1241 = vlaneseq
        %v1242 = vshrl.u32 %v1241, 7
        %v1243 = vsub.s32 0, %v1242
        %v1244 = vrot.slane %v1239, %v1243
        %v1250 = vunpack.c.l.b16 %v1235
        %v1251 = vunpack.c.l.b16 %v1236
        %v1252 = vunpack.c.l.b16 %v1237
        %v1253 = vunpack.c.l.b16 %v1238
        %v1254 = vpack.c.b16 %v1251, %v1250
        %v1255 = vpack.c.b16 %v1253, %v1252
        %v1259 = vsel %vm715, %v1234, 0
        %1261 = vmatprep.subr.bf16.mxu0 0
        %1262 = vmatpush1.bf16.msra.mxu0 %v1254
        %1263 = vmatprep.subr.bf16.mxu0 0
        %1264 = vmatpush1.bf16.msra.mxu0 %v1255
        %1265 = vmatprep.subr.bf16.mxu0 0
        %1266 = vmatpush1.bf16.msra.mxu0 0
        %1267 = vmatprep.subr.bf16.mxu0 0
        %1268 = vmatpush1.bf16.msra.mxu0 0
        %1269 = vmatprep.subr.bf16.mxu0 0
        %1270 = vmatpush1.bf16.msra.mxu0 0
        %1271 = vmatprep.subr.bf16.mxu0 0
        %1272 = vmatpush1.bf16.msra.mxu0 0
        %1273 = vmatprep.subr.bf16.mxu0 0
        %1274 = vmatpush1.bf16.msra.mxu0 0
        %1275 = vmatprep.subr.bf16.mxu0 0
        %1276 = vmatpush1.bf16.msra.mxu0 0
        %1277 = vmatprep.subr.bf16.mxu0 0
        %1278 = vmatpush1.bf16.msra.mxu0 0
        %1279 = vmatprep.subr.bf16.mxu0 0
        %1280 = vmatpush1.bf16.msra.mxu0 0
        %1281 = vmatprep.subr.bf16.mxu0 0
        %1282 = vmatpush1.bf16.msra.mxu0 0
        %1283 = vmatprep.subr.bf16.mxu0 0
        %1284 = vmatpush1.bf16.msra.mxu0 0
        %1285 = vmatprep.subr.bf16.mxu0 0
        %1286 = vmatpush1.bf16.msra.mxu0 0
        %1287 = vmatprep.subr.bf16.mxu0 0
        %1288 = vmatpush1.bf16.msra.mxu0 0
        %1289 = vmatprep.subr.bf16.mxu0 0
        %1290 = vmatpush1.bf16.msra.mxu0 0
        %1291 = vmatprep.subr.bf16.mxu0 0
        %1292 = vmatpush1.bf16.msra.mxu0 0
        %1293 = vmatprep.mubr.bf16.mxu0 0
        %1294 = vmatmul.mubr.bf16.gmra.mrb[0].mxu0 %v1259
        %v1295 = vpop.f32.mrb[0].mxu0
        %v1296 = vadd.f32 %v1244, %v1295
        %v1297 = vpop.f32.mrb[0].mxu0
        %v1298 = vpop.f32.mrb[0].mxu0
        %v1299 = vpop.f32.mrb[0].mxu0
        %1300 = vdwg.mxu0
        %v1301 = vadd.f32 %v689, %v1296
        %v1302 = vsel %vm715, %v1301, 0.0
        %1303 = vadd.xlane.f32.xlu0 %v1302
        %v1304 = vpop.xlane.xlu0 %1303
        %v1305 = vrcp.pop 32.0
        %v1306 = vmul.f32 %v1304, %v1305
        %v1307 = vsub.f32 %v1301, %v1306
        %v1308 = vmul.f32 %v1307, %v1307
        %v1309 = vsel %vm715, %v1308, 0.0
        %1310 = vadd.xlane.f32.xlu0 %v1309
        %v1311 = vpop.xlane.xlu0 %1310
        %v1312 = vmul.f32 %v1311, %v1305
        %v1313 = vadd.f32 %v1312, 1e-05
        %v1314 = vrsqrt.pop %v1313
        %v1315 = vmul.f32 %v1307, %v1314
        %v1316 = vld [vmem:[%s655] sm:$0x1]
        %v1318 = vlaneseq
        %v1319 = vshrl.u32 %v1318, 7
        %v1320 = vsub.s32 0, %v1319
        %v1321 = vrot.slane %v1316, %v1320
        %v1323 = vmul.f32 %v1315, %v1321
        %v1324 = vld [vmem:[%s658] sm:$0x1]
        %v1326 = vlaneseq
        %v1327 = vshrl.u32 %v1326, 7
        %v1328 = vsub.s32 0, %v1327
        %v1329 = vrot.slane %v1324, %v1328
        %v1331 = vadd.f32 %v1323, %v1329
        %v1332 = vpack.c.bf16 %v1331, %v1331
        %v1333 = vld [vmem:[%s663] sm:$0xf]
        %v1334 = vld [vmem:[%s663 + $0x4] sm:$0xf]
        %v1335 = vld [vmem:[%s663 + $0x8] sm:$0xf]
        %v1336 = vld [vmem:[%s663 + $0xc] sm:$0xf]
        %v1337 = vld [vmem:[%s666] sm:$0x1]
        %v1339 = vlaneseq
        %v1340 = vshrl.u32 %v1339, 7
        %v1341 = vsub.s32 0, %v1340
        %v1342 = vrot.slane %v1337, %v1341
        %v1348 = vunpack.c.l.b16 %v1333
        %v1349 = vunpack.c.l.b16 %v1334
        %v1350 = vunpack.c.l.b16 %v1335
        %v1351 = vunpack.c.l.b16 %v1336
        %v1352 = vpack.c.b16 %v1349, %v1348
        %v1353 = vpack.c.b16 %v1351, %v1350
        %v1357 = vsel %vm715, %v1332, 0
        %1359 = vmatprep.subr.bf16.mxu0 0
        %1360 = vmatpush1.bf16.msra.mxu0 %v1352
        %1361 = vmatprep.subr.bf16.mxu0 0
        %1362 = vmatpush1.bf16.msra.mxu0 %v1353
        %1363 = vmatprep.subr.bf16.mxu0 0
        %1364 = vmatpush1.bf16.msra.mxu0 0
        %1365 = vmatprep.subr.bf16.mxu0 0
        %1366 = vmatpush1.bf16.msra.mxu0 0
        %1367 = vmatprep.subr.bf16.mxu0 0
        %1368 = vmatpush1.bf16.msra.mxu0 0
        %1369 = vmatprep.subr.bf16.mxu0 0
        %1370 = vmatpush1.bf16.msra.mxu0 0
        %1371 = vmatprep.subr.bf16.mxu0 0
        %1372 = vmatpush1.bf16.msra.mxu0 0
        %1373 = vmatprep.subr.bf16.mxu0 0
        %1374 = vmatpush1.bf16.msra.mxu0 0
        %1375 = vmatprep.subr.bf16.mxu0 0
        %1376 = vmatpush1.bf16.msra.mxu0 0
        %1377 = vmatprep.subr.bf16.mxu0 0
        %1378 = vmatpush1.bf16.msra.mxu0 0
        %1379 = vmatprep.subr.bf16.mxu0 0
        %1380 = vmatpush1.bf16.msra.mxu0 0
        %1381 = vmatprep.subr.bf16.mxu0 0
        %1382 = vmatpush1.bf16.msra.mxu0 0
        %1383 = vmatprep.subr.bf16.mxu0 0
        %1384 = vmatpush1.bf16.msra.mxu0 0
        %1385 = vmatprep.subr.bf16.mxu0 0
        %1386 = vmatpush1.bf16.msra.mxu0 0
        %1387 = vmatprep.subr.bf16.mxu0 0
        %1388 = vmatpush1.bf16.msra.mxu0 0
        %1389 = vmatprep.subr.bf16.mxu0 0
        %1390 = vmatpush1.bf16.msra.mxu0 0
        %1391 = vmatprep.mubr.bf16.mxu0 0
        %1392 = vmatmul.mubr.bf16.gmra.mrb[0].mxu0 %v1357
        %v1393 = vpop.f32.mrb[0].mxu0
        %v1394 = vadd.f32 %v1342, %v1393
        %v1395 = vpop.f32.mrb[0].mxu0
        %v1396 = vpop.f32.mrb[0].mxu0
        %v1397 = vpop.f32.mrb[0].mxu0
        %1398 = vdwg.mxu0
        %v1399 = vmul.f32 %v1394, %v1394
        %v1400 = vmul.f32 %v1394, %v1399
        %v1401 = vmul.f32 %v1400, 0.044715
        %v1402 = vadd.f32 %v1394, %v1401
        %v1403 = vmul.f32 %v1402, 0.7978846
        %v1404 = vtanh.pop %v1403
        %v1405 = vadd.f32 %v1404, 1.0
        %v1406 = vmul.f32 %v1405, 0.5
        %v1407 = vmul.f32 %v1394, %v1406
        %v1408 = vpack.c.bf16 %v1407, %v1407
        %v1409 = vld [vmem:[%s671] sm:$0xf]
        %v1410 = vld [vmem:[%s671 + $0x4] sm:$0xf]
        %v1411 = vld [vmem:[%s671 + $0x8] sm:$0xf]
        %v1412 = vld [vmem:[%s671 + $0xc] sm:$0xf]
        %v1413 = vld [vmem:[%s671 + $0x10] sm:$0xf]
        %v1414 = vld [vmem:[%s671 + $0x14] sm:$0xf]
        %v1415 = vld [vmem:[%s671 + $0x18] sm:$0xf]
        %v1416 = vld [vmem:[%s671 + $0x1c] sm:$0xf]
        %v1417 = vld [vmem:[%s671 + $0x20] sm:$0xf]
        %v1418 = vld [vmem:[%s671 + $0x24] sm:$0xf]
        %v1419 = vld [vmem:[%s671 + $0x28] sm:$0xf]
        %v1420 = vld [vmem:[%s671 + $0x2c] sm:$0xf]
        %v1421 = vld [vmem:[%s671 + $0x30] sm:$0xf]
        %v1422 = vld [vmem:[%s671 + $0x34] sm:$0xf]
        %v1423 = vld [vmem:[%s671 + $0x38] sm:$0xf]
        %v1424 = vld [vmem:[%s671 + $0x3c] sm:$0xf]
        %v1425 = vld [vmem:[%s674] sm:$0x1]
        %v1427 = vlaneseq
        %v1428 = vshrl.u32 %v1427, 7
        %v1429 = vsub.s32 0, %v1428
        %v1430 = vrot.slane %v1425, %v1429
        %v1448 = vunpack.c.l.b16 %v1409
        %v1449 = vunpack.c.l.b16 %v1410
        %v1450 = vunpack.c.l.b16 %v1411
        %v1451 = vunpack.c.l.b16 %v1412
        %v1452 = vunpack.c.l.b16 %v1413
        %v1453 = vunpack.c.l.b16 %v1414
        %v1454 = vunpack.c.l.b16 %v1415
        %v1455 = vunpack.c.l.b16 %v1416
        %v1456 = vunpack.c.l.b16 %v1417
        %v1457 = vunpack.c.l.b16 %v1418
        %v1458 = vunpack.c.l.b16 %v1419
        %v1459 = vunpack.c.l.b16 %v1420
        %v1460 = vunpack.c.l.b16 %v1421
        %v1461 = vunpack.c.l.b16 %v1422
        %v1462 = vunpack.c.l.b16 %v1423
        %v1463 = vunpack.c.l.b16 %v1424
        %v1464 = vpack.c.b16 %v1449, %v1448
        %v1465 = vpack.c.b16 %v1451, %v1450
        %v1466 = vpack.c.b16 %v1453, %v1452
        %v1467 = vpack.c.b16 %v1455, %v1454
        %v1468 = vpack.c.b16 %v1457, %v1456
        %v1469 = vpack.c.b16 %v1459, %v1458
        %v1470 = vpack.c.b16 %v1461, %v1460
        %v1471 = vpack.c.b16 %v1463, %v1462
        %1480 = vmatprep.subr.bf16.mxu0 0
        %1481 = vmatpush1.bf16.msra.mxu0 %v1464
        %1482 = vmatprep.subr.bf16.mxu0 0
        %1483 = vmatpush1.bf16.msra.mxu0 %v1465
        %1484 = vmatprep.subr.bf16.mxu0 0
        %1485 = vmatpush1.bf16.msra.mxu0 %v1466
        %1486 = vmatprep.subr.bf16.mxu0 0
        %1487 = vmatpush1.bf16.msra.mxu0 %v1467
        %1488 = vmatprep.subr.bf16.mxu0 0
        %1489 = vmatpush1.bf16.msra.mxu0 %v1468
        %1490 = vmatprep.subr.bf16.mxu0 0
        %1491 = vmatpush1.bf16.msra.mxu0 %v1469
        %1492 = vmatprep.subr.bf16.mxu0 0
        %1493 = vmatpush1.bf16.msra.mxu0 %v1470
        %1494 = vmatprep.subr.bf16.mxu0 0
        %1495 = vmatpush1.bf16.msra.mxu0 %v1471
        %1496 = vmatprep.subr.bf16.mxu0 0
        %1497 = vmatpush1.bf16.msra.mxu0 0
        %1498 = vmatprep.subr.bf16.mxu0 0
        %1499 = vmatpush1.bf16.msra.mxu0 0
        %1500 = vmatprep.subr.bf16.mxu0 0
        %1501 = vmatpush1.bf16.msra.mxu0 0
        %1502 = vmatprep.subr.bf16.mxu0 0
        %1503 = vmatpush1.bf16.msra.mxu0 0
        %1504 = vmatprep.subr.bf16.mxu0 0
        %1505 = vmatpush1.bf16.msra.mxu0 0
        %1506 = vmatprep.subr.bf16.mxu0 0
        %1507 = vmatpush1.bf16.msra.mxu0 0
        %1508 = vmatprep.subr.bf16.mxu0 0
        %1509 = vmatpush1.bf16.msra.mxu0 0
        %1510 = vmatprep.subr.bf16.mxu0 0
        %1511 = vmatpush1.bf16.msra.mxu0 0
        %1512 = vmatprep.mubr.bf16.mxu0 0
        %1513 = vmatmul.mubr.bf16.gmra.mrb[0].mxu0 %v1408
        %v1514 = vpop.f32.mrb[0].mxu0
        %v1515 = vadd.f32 %v1430, %v1514
        %v1516 = vpop.f32.mrb[0].mxu0
        %v1517 = vpop.f32.mrb[0].mxu0
        %v1518 = vpop.f32.mrb[0].mxu0
        %1519 = vdwg.mxu0
        %v1520 = vadd.f32 %v1331, %v1515
        %v1521 = vsel %vm715, %v1520, 0.0
        %1522 = vadd.xlane.f32.xlu0 %v1521
        %v1523 = vpop.xlane.xlu0 %1522
        %v1524 = vmul.f32 %v1523, %v1305
        %v1525 = vsub.f32 %v1520, %v1524
        %v1526 = vmul.f32 %v1525, %v1525
        %v1527 = vsel %vm715, %v1526, 0.0
        %1528 = vadd.xlane.f32.xlu0 %v1527
        %v1529 = vpop.xlane.xlu0 %1528
        %v1530 = vmul.f32 %v1529, %v1305
        %v1531 = vadd.f32 %v1530, 1e-05
        %v1532 = vrsqrt.pop %v1531
        %v1533 = vmul.f32 %v1525, %v1532
        %v1534 = vld [vmem:[%s677] sm:$0x1]
        %v1536 = vlaneseq
        %v1537 = vshrl.u32 %v1536, 7
        %v1538 = vsub.s32 0, %v1537
        %v1539 = vrot.slane %v1534, %v1538
        %v1541 = vmul.f32 %v1533, %v1539
        %v1542 = vld [vmem:[%s680] sm:$0x1]
        %v1544 = vlaneseq
        %v1545 = vshrl.u32 %v1544, 7
        %v1546 = vsub.s32 0, %v1545
        %v1547 = vrot.slane %v1542, %v1546
        %v1549 = vadd.f32 %v1541, %v1547
        %1550 = vst.msk [vmem:[#allocation2] sm:$0xff] %vm715, %v1549
        %p1551 = scmp.eq.s32.totalorder %s33, 1
        // Predicated region
        $region81: #{tpu_custom_call.1} parent=75 // pred_check
          %p1552 = pneg %p1551
        $region82: #{tpu_custom_call.1} parent=75 // pred_check_branch
          %1554 = sbr.rel (%p1552) target = $region84
        $region83: #{tpu_custom_call.1} parent=75 // pred_region
          %1555 = vst.msk [vmem:[%s629] sm:$0xff] %vm715, %v1549
        $region84: #{tpu_custom_call.1} parent=75 // pred_fallthru
          _
        %s1556 = sand.u32 %s412, 1
        %s1557 = scalar_lea.sflag [#allocation4], %s1556
        %s1558 = sand.u32 %s412, 1
        %s1559 = smul.addr %s1558, 8
        %s1560 = scalar_lea.vmem [#allocation3], %s1559
        // Predicated region
        $region85: #{tpu_custom_call.1} parent=75 // pred_check
          %p1561 = pneg %p422
        $region86: #{tpu_custom_call.1} parent=75 // pred_check_branch
          %1563 = sbr.rel (%p1561) target = $region88
        $region87: #{tpu_custom_call.1} parent=75 // pred_region
          %s1565 = ssub.s32 128, 128
          %1566 = vsyncadd %s1557, %s1565
          %s1567 = smul.addr %s32, 128
          %s1568 = scalar_lea.hbm %s14, %s1567
          %s1570 = sshll.u32 %s1560, 4
          %s1571 = int_to_ptr.vmem [resolvable:$true] %s1570
          %1573 = dma.vmem_to_hbm [thread:$0]  %s1571, 128, %s1568, %s1557
        $region88: #{tpu_custom_call.1} parent=75 // pred_fallthru
          _
      $region76: #{tpu_custom_call.1} parent=5 // pred_fallthru
        _
      %p1574 = scmp.le.s32.totalorder 2, %s23
      // Predicated region
      $region89: #{tpu_custom_call.1} parent=5 // pred_check
        %p1575 = pneg %p1574
      $region90: #{tpu_custom_call.1} parent=5 // pred_check_branch
        %1577 = sbr.rel (%p1575) target = $region92
      $region91: #{tpu_custom_call.1} parent=5 // pred_region
        %s1578 = ssub.s32 %s23, 2
        // Predicated region
        $region93: #{tpu_custom_call.1} parent=91 // pred_check
          %p1579 = pneg %p428
        $region94: #{tpu_custom_call.1} parent=91 // pred_check_branch
          %1581 = sbr.rel (%p1579) target = $region96
        $region95: #{tpu_custom_call.1} parent=91 // pred_region
          %s1582 = sand.u32 %s413, 1
          %s1583 = scalar_lea.sflag [#allocation4], %s1582
          %s1584 = sand.u32 %s413, 1
          %s1585 = smul.addr %s1584, 8
          %s1586 = scalar_lea.vmem [#allocation3], %s1585
          %1587 = dma.done %s1583, 128
        $region96: #{tpu_custom_call.1} parent=91 // pred_fallthru
          _
      $region92: #{tpu_custom_call.1} parent=5 // pred_fallthru
        _
    $region6: #{tpu_custom_call.1} parent=1 // loop_footer
      %s27 = sadd.s32 1, %s23
    $region7: #{tpu_custom_call.1} parent=1 // loop_footer_branch
      %22 = sbr.rel target = $region3
    $region8: #{tpu_custom_call.1} parent=1 // loop_exit
      _
    %1588 = vsyncpa [#allocation4], 1
    %s1589 = scalar_lea.sflag [#allocation4], 1
    %1590 = vsyncpa %s1589, 1

</llo_original>
